<compile_context>
chip_gen: v7x
topology: tpu7x:2x2x1
jax: 0.10.0
libtpu: 0.0.40
codegen_flags: <defaults>
</compile_context>

<pallas_src>
import functools

import jax
import jax.numpy as jnp
from jax.experimental import pallas as pl
from jax.experimental.pallas import tpu as pltpu

INPUT_SIZE = 256
OUTPUT_SIZE = 4
LANE = 128        # lane tile
SUBLANE = 8       # f32 sublane tile
OUT_PAD = 128     # lane-dense padded output width (valid cols = OUTPUT_SIZE)


def _round_up(x, m):
    return ((x + m - 1) // m) * m


def _tensorcores_per_chip():
    """Best-effort detection of megacore chips (2 TensorCores per chip)."""
    try:
        kind = jax.devices()[0].device_kind.lower()
    except Exception:
        return 1
    return 2 if any(tag in kind for tag in ("v4", "v5p", "v7", "7x")) else 1


def _rnn_kernel(bb, chunk,
                x_ref, h0_ref, wih_ref, whh_ref, b_ref, wout_ref, bout_ref,
                y_ref, zh_scr, h_scr):
    """Grid point = (batch block, time chunk).

    Phase 1: bf16 input projection for the whole chunk (one MXU matmul).
    Phase 2: f32 serial recurrence over the chunk; the hidden state is carried
             across time chunks in h_scr (persistent VMEM scratch).
    Phase 3: bf16 output projection for the whole chunk (lane-dense store).
    """
    t_chunk = pl.program_id(1)

    # First chunk of each batch block: (re)initialise the carried hidden state
    # from the learned h0 (already broadcast across the batch rows).
    @pl.when(t_chunk == 0)
    def _():
        h_scr[...] = h0_ref[...]

    # Phase 1: z = x @ W_ih^T + (b_ih + b_hh) for every timestep of the chunk.
    # bf16 operands, f32 MXU accumulation; bias folded in once per chunk.
    zh_scr[...] = (jnp.dot(x_ref[0], wih_ref[...],
                           preferred_element_type=jnp.float32) + b_ref[...])

    whh = whh_ref[...]        # loop-invariant recurrent weights (f32)

    # Phase 2: sequential recurrence.  Only h @ W_hh^T + tanh is on the serial
    # path.  Each step overwrites its z rows with the new hidden state (the z
    # rows are consumed exactly once, so the scratch is reused in place).
    def step(t, h):
        row = pl.multiple_of(t * bb, bb)        # tile-aligned sublane offset
        pre = zh_scr[pl.ds(row, bb), :] + jnp.dot(
            h, whh, preferred_element_type=jnp.float32)
        h_new = jnp.tanh(pre)
        zh_scr[pl.ds(row, bb), :] = h_new
        return h_new

    # `chunk` is a small static trip count -> full unroll is cheap and keeps
    # LLO scheduling visibility without bloating code for long sequences.
    h_last = jax.lax.fori_loop(0, chunk, step, h_scr[...], unroll=True)
    h_scr[...] = h_last                         # carry to the next time chunk

    # Phase 3: batched, lane-dense output projection for the chunk (bf16 MXU,
    # f32 accumulation); full-vreg stores into the 128-wide output slab.
    y_ref[0] = (jnp.dot(zh_scr[...].astype(jnp.bfloat16), wout_ref[...],
                        preferred_element_type=jnp.float32) + bout_ref[...])


def _call_kernel(x_flat, h0_p, wih_p, whh_p, b_p, wout_p, bout_p,
                 *, nb, bb, chunk, n_chunks, hp, single_buffer_consts):
    f32 = jnp.float32
    rows = chunk * bb

    # Constants (index_map never changes): single-buffer them if supported.
    consts_kwargs = (dict(pipeline_mode=pl.Buffered(1))
                     if single_buffer_consts else {})

    in_specs = [
        pl.BlockSpec((1, rows, INPUT_SIZE), lambda b, t: (b, t, 0)),   # x chunk
        pl.BlockSpec((bb, hp), lambda b, t: (b, 0)),                   # h0 rows
        pl.BlockSpec((INPUT_SIZE, hp), lambda b, t: (0, 0), **consts_kwargs),
        pl.BlockSpec((hp, hp), lambda b, t: (0, 0), **consts_kwargs),
        pl.BlockSpec((1, hp), lambda b, t: (0, 0), **consts_kwargs),
        pl.BlockSpec((hp, OUT_PAD), lambda b, t: (0, 0), **consts_kwargs),
        pl.BlockSpec((1, OUT_PAD), lambda b, t: (0, 0), **consts_kwargs),
    ]
    out_spec = pl.BlockSpec((1, rows, OUT_PAD), lambda b, t: (b, t, 0))

    # Explicit VMEM budget (conservatively assumes double buffering everywhere),
    # so v5e's 16 MiB default scoped limit never bites and v7x stays in bounds.
    vmem_needed = (
        2 * rows * INPUT_SIZE * 2            # x chunk (bf16), double-buffered
        + 2 * rows * OUT_PAD * 4             # y chunk (f32), double-buffered
        + 2 * bb * hp * 4                    # h0
        + 2 * INPUT_SIZE * hp * 2            # W_ih^T (bf16)
        + 2 * hp * hp * 4                    # W_hh^T (f32)
        + 2 * hp * 4                         # fused bias
        + 2 * hp * OUT_PAD * 2               # W_out^T (bf16)
        + 2 * OUT_PAD * 4                    # b_out
        + rows * hp * 4 + bb * hp * 4        # scratch (zh + hidden-state carry)
    )
    vmem_limit = int(min(2 * vmem_needed + (8 << 20), 100 << 20))

    return pl.pallas_call(
        functools.partial(_rnn_kernel, bb, chunk),
        out_shape=jax.ShapeDtypeStruct((nb, n_chunks * rows, OUT_PAD), f32),
        grid_spec=pltpu.PrefetchScalarGridSpec(
            num_scalar_prefetch=0,
            grid=(nb, n_chunks),
            in_specs=in_specs,
            out_specs=out_spec,
            scratch_shapes=[
                pltpu.VMEM((rows, hp), f32),   # z for the chunk, then hidden states
                pltpu.VMEM((bb, hp), f32),     # carried hidden state
            ],
        ),
        compiler_params=pltpu.CompilerParams(
            dimension_semantics=("parallel", "arbitrary"),
            vmem_limit_bytes=vmem_limit),
    )(x_flat, h0_p, wih_p, whh_p, b_p, wout_p, bout_p)


def baseline_forward(sequence, params, *, time_chunk=32, batch_shards=None):
    """sequence: (batch, seq, 256) float32 -> predictions (seq, batch, 4)."""
    x = jnp.transpose(sequence, (1, 0, 2))            # (T, B, 256) time-major
    T, B, F = x.shape
    assert F == INPUT_SIZE
    H = params["w_ih"].shape[0]

    f32, bf16 = jnp.float32, jnp.bfloat16
    Hp = _round_up(H, LANE)

    # Megacore chips get a 2-way "parallel" batch split when the batch is big
    # enough; single-core chips keep one block so the serial recurrence is not
    # replicated (a split on one core would just serialize more steps).
    if batch_shards is None:
        batch_shards = 2 if (_tensorcores_per_chip() >= 2 and B >= 16) else 1
    nb = max(1, int(batch_shards))
    Bp = _round_up(B, nb * SUBLANE)
    BB = Bp // nb

    # Time chunking: chunk kept even so the bf16 x block second-to-last dim is a
    # multiple of 16 sublanes.
    chunk = max(2, min(int(time_chunk), T))
    if chunk % 2:
        chunk += 1
    Tp = _round_up(T, chunk)
    n_chunks = Tp // chunk

    # Zero-padded, pre-transposed weights.  Padded hidden lanes provably stay 0
    # (zero-padded W_ih / W_hh / bias and tanh(0) = 0); padded batch/time rows
    # are sliced off at the end.
    wih_p = (jnp.zeros((F, Hp), f32)
             .at[:, :H].set(params["w_ih"].T.astype(f32)).astype(bf16))
    whh_p = jnp.zeros((Hp, Hp), f32).at[:H, :H].set(params["w_hh"].T.astype(f32))
    b_p = jnp.zeros((1, Hp), f32).at[:, :H].set(
        (params["b_ih"] + params["b_hh"]).astype(f32)[None, :])
    wout_p = (jnp.zeros((Hp, OUT_PAD), f32)
              .at[:H, :OUTPUT_SIZE].set(params["w_out"].T.astype(f32)).astype(bf16))
    bout_p = jnp.zeros((1, OUT_PAD), f32).at[:, :OUTPUT_SIZE].set(
        params["b_out"].astype(f32)[None, :])
    h0_p = jnp.zeros((Bp, Hp), f32).at[:, :H].set(
        jnp.broadcast_to(params["h0"].reshape(1, H).astype(f32), (Bp, H)))

    # Pad (time, batch), shard the batch, flatten so row = t*BB + local_batch,
    # and cast x to bf16 (halves its HBM traffic; matmul accumulates in f32).
    x_p = jnp.zeros((Tp, Bp, F), f32).at[:T, :B, :].set(x.astype(f32))
    x_flat = (x_p.reshape(Tp, nb, BB, F).transpose(1, 0, 2, 3)
              .reshape(nb, Tp * BB, F).astype(bf16))

    kwargs = dict(nb=nb, bb=BB, chunk=chunk, n_chunks=n_chunks, hp=Hp)
    try:
        y = _call_kernel(x_flat, h0_p, wih_p, whh_p, b_p, wout_p, bout_p,
                         single_buffer_consts=True, **kwargs)
    except Exception:
        # Fallback if this JAX build rejects pipeline_mode=pl.Buffered(1);
        # default double-buffering of the constants only costs a little VMEM.
        y = _call_kernel(x_flat, h0_p, wih_p, whh_p, b_p, wout_p, bout_p,
                         single_buffer_consts=False, **kwargs)

    # Un-shard / un-pad: (nb, Tp*BB, OUT_PAD) -> (T, B, OUTPUT_SIZE).
    y = (y.reshape(nb, Tp, BB, OUT_PAD).transpose(1, 0, 2, 3)
         .reshape(Tp, Bp, OUT_PAD)[:T, :B, :OUTPUT_SIZE])
    return y


def init_params(key, hidden_size):
    """Deterministic init mirroring PyTorch shapes (uniform +/- 1/sqrt(H), randn h0)."""
    ks = jax.random.split(key, 7)
    bound = 1.0 / jnp.sqrt(hidden_size)
    u = lambda k, shape: jax.random.uniform(k, shape, jnp.float32, -bound, bound)
    return {
        "w_ih": u(ks[0], (hidden_size, INPUT_SIZE)),
        "w_hh": u(ks[1], (hidden_size, hidden_size)),
        "b_ih": u(ks[2], (hidden_size,)),
        "b_hh": u(ks[3], (hidden_size,)),
        "w_out": u(ks[4], (OUTPUT_SIZE, hidden_size)),
        "b_out": u(ks[5], (OUTPUT_SIZE,)),
        "h0": jax.random.normal(ks[6], (1, 1, hidden_size), jnp.float32),
    }


def reference_forward(sequence, params):
    """Pure-f32 JAX reference of the PyTorch forward."""
    x = jnp.transpose(sequence, (1, 0, 2))            # (T, B, 256)
    B = x.shape[1]
    H = params["w_ih"].shape[0]
    h = jnp.broadcast_to(params["h0"].reshape(1, H), (B, H))

    def step(h, x_t):
        h_new = jnp.tanh(x_t @ params["w_ih"].T + params["b_ih"]
                         + h @ params["w_hh"].T + params["b_hh"])
        return h_new, h_new

    _, hs = jax.lax.scan(step, h, x)                  # (T, B, H)
    return hs @ params["w_out"].T + params["b_out"]   # (T, B, 4)


def reference_forward_mixed(sequence, params):
    """Reference mirroring the kernel's precision: bf16 input/output projections
    with f32 accumulation, f32 recurrence / tanh / hidden state."""
    bf16, f32 = jnp.bfloat16, jnp.float32
    x = jnp.transpose(sequence, (1, 0, 2)).astype(bf16)
    B = x.shape[1]
    H = params["w_ih"].shape[0]
    wih = params["w_ih"].T.astype(bf16)
    whh = params["w_hh"].T.astype(f32)
    bias = (params["b_ih"] + params["b_hh"]).astype(f32)
    wout = params["w_out"].T.astype(bf16)
    h = jnp.broadcast_to(params["h0"].reshape(1, H), (B, H)).astype(f32)

    def step(h, x_t):
        z = jnp.dot(x_t, wih, preferred_element_type=f32) + bias
        h_new = jnp.tanh(z + jnp.dot(h, whh, preferred_element_type=f32))
        return h_new, h_new

    _, hs = jax.lax.scan(step, h, x)
    return (jnp.dot(hs.astype(bf16), wout, preferred_element_type=f32)
            + params["b_out"].astype(f32))


if __name__ == "__main__":
    key = jax.random.PRNGKey(0)
    k_param, k_x, k_x2 = jax.random.split(key, 3)

    hidden_size = 32
    batch, seq = 2, 8

    params = init_params(k_param, hidden_size)
    sequence = jax.random.normal(k_x, (batch, seq, INPUT_SIZE), jnp.float32)

    ref_mixed = reference_forward_mixed(sequence, params)
    ref_f32 = reference_forward(sequence, params)

    # Multi-chunk path: time_chunk=4 -> 2 pipelined chunks, hidden state carried
    # across grid steps in VMEM scratch.
    preds = jax.block_until_ready(baseline_forward(sequence, params, time_chunk=4))
    assert preds.shape == (seq, batch, OUTPUT_SIZE)
    # Tight check vs a reference mirroring the kernel's precision choices.
    assert jnp.allclose(preds, ref_mixed, atol=1e-3, rtol=1e-3)
    # Looser check vs the pure-f32 PyTorch-equivalent reference (bf16 MXU
    # projections with f32 accumulation; recurrence kept in f32).
    assert jnp.allclose(preds, ref_f32, atol=5e-2, rtol=5e-2)

    # Default chunking (single chunk at these shapes).
    preds_1c = jax.block_until_ready(baseline_forward(sequence, params))
    assert jnp.allclose(preds_1c, ref_mixed, atol=1e-3, rtol=1e-3)

    # Exercise the 2-way batch-sharded ("parallel" batch axis) grid layout —
    # correct on any chip, and split across the two TensorCores on megacore.
    batch2, seq2 = 16, 6
    sequence2 = jax.random.normal(k_x2, (batch2, seq2, INPUT_SIZE), jnp.float32)
    preds2 = jax.block_until_ready(
        baseline_forward(sequence2, params, time_chunk=4, batch_shards=2))
    assert preds2.shape == (seq2, batch2, OUTPUT_SIZE)
    assert jnp.allclose(preds2, reference_forward_mixed(sequence2, params),
                        atol=1e-3, rtol=1e-3)
    assert jnp.allclose(preds2, reference_forward(sequence2, params),
                        atol=5e-2, rtol=5e-2)

    print("KERNEL_OK")
</pallas_src>

<mosaic_0001>
module attributes {stable_mosaic.version = 11 : i64} {
  func.func @_rnn_kernel(%arg0: i32, %arg1: i32, %arg2: memref<1x32x256xbf16, #tpu.memory_space<vmem>>, %arg3: memref<8x128xf32, #tpu.memory_space<vmem>>, %arg4: memref<256x128xbf16, #tpu.memory_space<vmem>>, %arg5: memref<128x128xf32, #tpu.memory_space<vmem>>, %arg6: memref<1x128xf32, #tpu.memory_space<vmem>>, %arg7: memref<128x128xbf16, #tpu.memory_space<vmem>>, %arg8: memref<1x128xf32, #tpu.memory_space<vmem>>, %arg9: memref<1x32x128xf32, #tpu.memory_space<vmem>>, %arg10: memref<32x128xf32, #tpu.memory_space<vmem>>, %arg11: memref<8x128xf32, #tpu.memory_space<vmem>>) attributes {dimension_semantics = [#tpu.dimension_semantics<parallel>, #tpu.dimension_semantics<arbitrary>], iteration_bounds = array<i64: 1, 2>, scalar_prefetch = 0 : i64, scratch_operands = 2 : i64, tpu.core_type = #tpu.core_type<tc>, window_params = [{transform_indices = @transform_0, window_bounds = array<i64: 1, 32, 256>}, {transform_indices = @transform_1, window_bounds = array<i64: 8, 128>}, {pipeline_mode = #tpu.pipeline_mode<synchronous>, transform_indices = @transform_2, window_bounds = array<i64: 256, 128>}, {pipeline_mode = #tpu.pipeline_mode<synchronous>, transform_indices = @transform_3, window_bounds = array<i64: 128, 128>}, {pipeline_mode = #tpu.pipeline_mode<synchronous>, transform_indices = @transform_4, window_bounds = array<i64: 1, 128>}, {pipeline_mode = #tpu.pipeline_mode<synchronous>, transform_indices = @transform_5, window_bounds = array<i64: 128, 128>}, {pipeline_mode = #tpu.pipeline_mode<synchronous>, transform_indices = @transform_6, window_bounds = array<i64: 1, 128>}, {transform_indices = @transform_7, window_bounds = array<i64: 1, 32, 128>}]} {
    %c0_i32 = arith.constant 0 : i32
    %0 = arith.cmpi eq, %arg1, %c0_i32 : i32
    %1 = arith.extui %0 : i1 to i32
    %c0_i32_0 = arith.constant 0 : i32
    %2 = arith.cmpi ne, %1, %c0_i32_0 : i32
    scf.if %2 {
      %c0_41 = arith.constant 0 : index
      %c0_42 = arith.constant 0 : index
      %60 = vector.load %arg3[%c0_41, %c0_42] : memref<8x128xf32, #tpu.memory_space<vmem>>, vector<8x128xf32>
      %c0_43 = arith.constant 0 : index
      %c0_44 = arith.constant 0 : index
      %61 = vector.load %arg11[%c0_43, %c0_44] : memref<8x128xf32, #tpu.memory_space<vmem>>, vector<8x128xf32>
      tpu.vector_store %arg11[%c0_43, %c0_44], %60 {strides = array<i32>} : memref<8x128xf32, #tpu.memory_space<vmem>>, vector<8x128xf32>,
    } else {
    }
    %c0 = arith.constant 0 : index
    %c0_1 = arith.constant 0 : index
    %c0_2 = arith.constant 0 : index
    %3 = vector.load %arg2[%c0, %c0_1, %c0_2] : memref<1x32x256xbf16, #tpu.memory_space<vmem>>, vector<1x32x256xbf16>
    %4 = vector.shape_cast %3 : vector<1x32x256xbf16> to vector<32x256xbf16>
    %c0_3 = arith.constant 0 : index
    %c0_4 = arith.constant 0 : index
    %5 = vector.load %arg4[%c0_3, %c0_4] : memref<256x128xbf16, #tpu.memory_space<vmem>>, vector<256x128xbf16>
    %cst = arith.constant dense<0.000000e+00> : vector<32x128xf32>
    %6 = tpu.matmul %4, %5, %cst {dimension_numbers = #tpu.dot_dimension_numbers<[1], [0], [0], [1], [0, 0, 1, 1], [], []>} : vector<32x256xbf16>, vector<256x128xbf16>, vector<32x128xf32> -> vector<32x128xf32>
    %c0_5 = arith.constant 0 : index
    %c0_6 = arith.constant 0 : index
    %7 = vector.load %arg6[%c0_5, %c0_6] : memref<1x128xf32, #tpu.memory_space<vmem>>, vector<1x128xf32>
    %8 = vector.broadcast %7 : vector<1x128xf32> to vector<32x128xf32>
    %9 = arith.addf %6, %8 : vector<32x128xf32>
    %c0_7 = arith.constant 0 : index
    %c0_8 = arith.constant 0 : index
    %10 = vector.load %arg10[%c0_7, %c0_8] : memref<32x128xf32, #tpu.memory_space<vmem>>, vector<32x128xf32>
    tpu.vector_store %arg10[%c0_7, %c0_8], %9 {strides = array<i32>} : memref<32x128xf32, #tpu.memory_space<vmem>>, vector<32x128xf32>,
    %c0_9 = arith.constant 0 : index
    %c0_10 = arith.constant 0 : index
    %11 = vector.load %arg5[%c0_9, %c0_10] : memref<128x128xf32, #tpu.memory_space<vmem>>, vector<128x128xf32>
    %c0_11 = arith.constant 0 : index
    %c0_12 = arith.constant 0 : index
    %12 = vector.load %arg11[%c0_11, %c0_12] : memref<8x128xf32, #tpu.memory_space<vmem>>, vector<8x128xf32>
    %c0_i32_13 = arith.constant 0 : i32
    %c8_i32 = arith.constant 8 : i32
    %13 = arith.muli %c0_i32_13, %c8_i32 : i32
    %14 = tpu.assume_multiple %13, 8 : i32
    %15 = arith.index_cast %14 : i32 to index
    %c0_14 = arith.constant 0 : index
    %16 = vector.load %arg10[%15, %c0_14] : memref<32x128xf32, #tpu.memory_space<vmem>>, vector<8x128xf32>
    %cst_15 = arith.constant dense<0.000000e+00> : vector<8x128xf32>
    %17 = tpu.matmul %12, %11, %cst_15 {dimension_numbers = #tpu.dot_dimension_numbers<[1], [0], [0], [1], [0, 0, 1, 1], [], []>} : vector<8x128xf32>, vector<128x128xf32>, vector<8x128xf32> -> vector<8x128xf32>
    %18 = arith.addf %16, %17 : vector<8x128xf32>
    %19 = math.tanh %18 : vector<8x128xf32>
    %20 = arith.index_cast %14 : i32 to index
    %c0_16 = arith.constant 0 : index
    %21 = vector.load %arg10[%20, %c0_16] : memref<32x128xf32, #tpu.memory_space<vmem>>, vector<8x128xf32>
    tpu.vector_store %arg10[%20, %c0_16], %19 {strides = array<i32>} : memref<32x128xf32, #tpu.memory_space<vmem>>, vector<8x128xf32>,
    %c1_i32 = arith.constant 1 : i32
    %c8_i32_17 = arith.constant 8 : i32
    %22 = arith.muli %c1_i32, %c8_i32_17 : i32
    %23 = tpu.assume_multiple %22, 8 : i32
    %24 = arith.index_cast %23 : i32 to index
    %c0_18 = arith.constant 0 : index
    %25 = vector.load %arg10[%24, %c0_18] : memref<32x128xf32, #tpu.memory_space<vmem>>, vector<8x128xf32>
    %cst_19 = arith.constant dense<0.000000e+00> : vector<8x128xf32>
    %26 = tpu.matmul %19, %11, %cst_19 {dimension_numbers = #tpu.dot_dimension_numbers<[1], [0], [0], [1], [0, 0, 1, 1], [], []>} : vector<8x128xf32>, vector<128x128xf32>, vector<8x128xf32> -> vector<8x128xf32>
    %27 = arith.addf %25, %26 : vector<8x128xf32>
    %28 = math.tanh %27 : vector<8x128xf32>
    %29 = arith.index_cast %23 : i32 to index
    %c0_20 = arith.constant 0 : index
    %30 = vector.load %arg10[%29, %c0_20] : memref<32x128xf32, #tpu.memory_space<vmem>>, vector<8x128xf32>
    tpu.vector_store %arg10[%29, %c0_20], %28 {strides = array<i32>} : memref<32x128xf32, #tpu.memory_space<vmem>>, vector<8x128xf32>,
    %c2_i32 = arith.constant 2 : i32
    %c8_i32_21 = arith.constant 8 : i32
    %31 = arith.muli %c2_i32, %c8_i32_21 : i32
    %32 = tpu.assume_multiple %31, 8 : i32
    %33 = arith.index_cast %32 : i32 to index
    %c0_22 = arith.constant 0 : index
    %34 = vector.load %arg10[%33, %c0_22] : memref<32x128xf32, #tpu.memory_space<vmem>>, vector<8x128xf32>
    %cst_23 = arith.constant dense<0.000000e+00> : vector<8x128xf32>
    %35 = tpu.matmul %28, %11, %cst_23 {dimension_numbers = #tpu.dot_dimension_numbers<[1], [0], [0], [1], [0, 0, 1, 1], [], []>} : vector<8x128xf32>, vector<128x128xf32>, vector<8x128xf32> -> vector<8x128xf32>
    %36 = arith.addf %34, %35 : vector<8x128xf32>
    %37 = math.tanh %36 : vector<8x128xf32>
    %38 = arith.index_cast %32 : i32 to index
    %c0_24 = arith.constant 0 : index
    %39 = vector.load %arg10[%38, %c0_24] : memref<32x128xf32, #tpu.memory_space<vmem>>, vector<8x128xf32>
    tpu.vector_store %arg10[%38, %c0_24], %37 {strides = array<i32>} : memref<32x128xf32, #tpu.memory_space<vmem>>, vector<8x128xf32>,
    %c3_i32 = arith.constant 3 : i32
    %c8_i32_25 = arith.constant 8 : i32
    %40 = arith.muli %c3_i32, %c8_i32_25 : i32
    %41 = tpu.assume_multiple %40, 8 : i32
    %42 = arith.index_cast %41 : i32 to index
    %c0_26 = arith.constant 0 : index
    %43 = vector.load %arg10[%42, %c0_26] : memref<32x128xf32, #tpu.memory_space<vmem>>, vector<8x128xf32>
    %cst_27 = arith.constant dense<0.000000e+00> : vector<8x128xf32>
    %44 = tpu.matmul %37, %11, %cst_27 {dimension_numbers = #tpu.dot_dimension_numbers<[1], [0], [0], [1], [0, 0, 1, 1], [], []>} : vector<8x128xf32>, vector<128x128xf32>, vector<8x128xf32> -> vector<8x128xf32>
    %45 = arith.addf %43, %44 : vector<8x128xf32>
    %46 = math.tanh %45 : vector<8x128xf32>
    %47 = arith.index_cast %41 : i32 to index
    %c0_28 = arith.constant 0 : index
    %48 = vector.load %arg10[%47, %c0_28] : memref<32x128xf32, #tpu.memory_space<vmem>>, vector<8x128xf32>
    tpu.vector_store %arg10[%47, %c0_28], %46 {strides = array<i32>} : memref<32x128xf32, #tpu.memory_space<vmem>>, vector<8x128xf32>,
    %c4_i32 = arith.constant 4 : i32
    %c0_29 = arith.constant 0 : index
    %c0_30 = arith.constant 0 : index
    %49 = vector.load %arg11[%c0_29, %c0_30] : memref<8x128xf32, #tpu.memory_space<vmem>>, vector<8x128xf32>
    tpu.vector_store %arg11[%c0_29, %c0_30], %46 {strides = array<i32>} : memref<8x128xf32, #tpu.memory_space<vmem>>, vector<8x128xf32>,
    %c0_31 = arith.constant 0 : index
    %c0_32 = arith.constant 0 : index
    %50 = vector.load %arg10[%c0_31, %c0_32] : memref<32x128xf32, #tpu.memory_space<vmem>>, vector<32x128xf32>
    %51 = arith.truncf %50 : vector<32x128xf32> to vector<32x128xbf16>
    %c0_33 = arith.constant 0 : index
    %c0_34 = arith.constant 0 : index
    %52 = vector.load %arg7[%c0_33, %c0_34] : memref<128x128xbf16, #tpu.memory_space<vmem>>, vector<128x128xbf16>
    %cst_35 = arith.constant dense<0.000000e+00> : vector<32x128xf32>
    %53 = tpu.matmul %51, %52, %cst_35 {dimension_numbers = #tpu.dot_dimension_numbers<[1], [0], [0], [1], [0, 0, 1, 1], [], []>} : vector<32x128xbf16>, vector<128x128xbf16>, vector<32x128xf32> -> vector<32x128xf32>
    %c0_36 = arith.constant 0 : index
    %c0_37 = arith.constant 0 : index
    %54 = vector.load %arg8[%c0_36, %c0_37] : memref<1x128xf32, #tpu.memory_space<vmem>>, vector<1x128xf32>
    %55 = vector.broadcast %54 : vector<1x128xf32> to vector<32x128xf32>
    %56 = arith.addf %53, %55 : vector<32x128xf32>
    %c0_38 = arith.constant 0 : index
    %c0_39 = arith.constant 0 : index
    %c0_40 = arith.constant 0 : index
    %57 = vector.load %arg9[%c0_38, %c0_39, %c0_40] : memref<1x32x128xf32, #tpu.memory_space<vmem>>, vector<1x32x128xf32>
    %58 = vector.shape_cast %57 : vector<1x32x128xf32> to vector<32x128xf32>
    %59 = vector.shape_cast %56 : vector<32x128xf32> to vector<1x32x128xf32>
    tpu.vector_store %arg9[%c0_38, %c0_39, %c0_40], %59 {strides = array<i32>} : memref<1x32x128xf32, #tpu.memory_space<vmem>>, vector<1x32x128xf32>,
    return
  }
  func.func @transform_0(%arg0: i32, %arg1: i32) -> (i32, i32, i32) {
    %c0_i32 = arith.constant 0 : i32
    %c0_i32_0 = arith.constant 0 : i32
    return %arg0, %arg1, %c0_i32 : i32, i32, i32
  }
  func.func @transform_1(%arg0: i32, %arg1: i32) -> (i32, i32) {
    %c0_i32 = arith.constant 0 : i32
    %c0_i32_0 = arith.constant 0 : i32
    return %arg0, %c0_i32 : i32, i32
  }
  func.func @transform_2(%arg0: i32, %arg1: i32) -> (i32, i32) {
    %c0_i32 = arith.constant 0 : i32
    %c0_i32_0 = arith.constant 0 : i32
    %c0_i32_1 = arith.constant 0 : i32
    return %c0_i32, %c0_i32_0 : i32, i32
  }
  func.func @transform_3(%arg0: i32, %arg1: i32) -> (i32, i32) {
    %c0_i32 = arith.constant 0 : i32
    %c0_i32_0 = arith.constant 0 : i32
    %c0_i32_1 = arith.constant 0 : i32
    return %c0_i32, %c0_i32_0 : i32, i32
  }
  func.func @transform_4(%arg0: i32, %arg1: i32) -> (i32, i32) {
    %c0_i32 = arith.constant 0 : i32
    %c0_i32_0 = arith.constant 0 : i32
    %c0_i32_1 = arith.constant 0 : i32
    return %c0_i32, %c0_i32_0 : i32, i32
  }
  func.func @transform_5(%arg0: i32, %arg1: i32) -> (i32, i32) {
    %c0_i32 = arith.constant 0 : i32
    %c0_i32_0 = arith.constant 0 : i32
    %c0_i32_1 = arith.constant 0 : i32
    return %c0_i32, %c0_i32_0 : i32, i32
  }
  func.func @transform_6(%arg0: i32, %arg1: i32) -> (i32, i32) {
    %c0_i32 = arith.constant 0 : i32
    %c0_i32_0 = arith.constant 0 : i32
    %c0_i32_1 = arith.constant 0 : i32
    return %c0_i32, %c0_i32_0 : i32, i32
  }
  func.func @transform_7(%arg0: i32, %arg1: i32) -> (i32, i32, i32) {
    %c0_i32 = arith.constant 0 : i32
    %c0_i32_0 = arith.constant 0 : i32
    return %arg0, %arg1, %c0_i32 : i32, i32, i32
  }
}

module attributes {stable_mosaic.version = 11 : i64} {
  func.func @_rnn_kernel(%arg0: i32, %arg1: i32, %arg2: memref<1x32x256xbf16, #tpu.memory_space<vmem>>, %arg3: memref<8x128xf32, #tpu.memory_space<vmem>>, %arg4: memref<256x128xbf16, #tpu.memory_space<vmem>>, %arg5: memref<128x128xf32, #tpu.memory_space<vmem>>, %arg6: memref<1x128xf32, #tpu.memory_space<vmem>>, %arg7: memref<128x128xbf16, #tpu.memory_space<vmem>>, %arg8: memref<1x128xf32, #tpu.memory_space<vmem>>, %arg9: memref<1x32x128xf32, #tpu.memory_space<vmem>>, %arg10: memref<32x128xf32, #tpu.memory_space<vmem>>, %arg11: memref<8x128xf32, #tpu.memory_space<vmem>>) attributes {dimension_semantics = [#tpu.dimension_semantics<parallel>, #tpu.dimension_semantics<arbitrary>], iteration_bounds = array<i64: 1, 2>, scalar_prefetch = 0 : i64, scratch_operands = 2 : i64, tpu.core_type = #tpu.core_type<tc>, window_params = [{transform_indices = @transform_0, window_bounds = array<i64: 1, 32, 256>}, {transform_indices = @transform_1, window_bounds = array<i64: 8, 128>}, {pipeline_mode = #tpu.pipeline_mode<synchronous>, transform_indices = @transform_2, window_bounds = array<i64: 256, 128>}, {pipeline_mode = #tpu.pipeline_mode<synchronous>, transform_indices = @transform_3, window_bounds = array<i64: 128, 128>}, {pipeline_mode = #tpu.pipeline_mode<synchronous>, transform_indices = @transform_4, window_bounds = array<i64: 1, 128>}, {pipeline_mode = #tpu.pipeline_mode<synchronous>, transform_indices = @transform_5, window_bounds = array<i64: 128, 128>}, {pipeline_mode = #tpu.pipeline_mode<synchronous>, transform_indices = @transform_6, window_bounds = array<i64: 1, 128>}, {transform_indices = @transform_7, window_bounds = array<i64: 1, 32, 128>}]} {
    %c0_i32 = arith.constant 0 : i32
    %0 = arith.cmpi eq, %arg1, %c0_i32 : i32
    %1 = arith.extui %0 : i1 to i32
    %c0_i32_0 = arith.constant 0 : i32
    %2 = arith.cmpi ne, %1, %c0_i32_0 : i32
    scf.if %2 {
      %c0_41 = arith.constant 0 : index
      %c0_42 = arith.constant 0 : index
      %60 = vector.load %arg3[%c0_41, %c0_42] : memref<8x128xf32, #tpu.memory_space<vmem>>, vector<8x128xf32>
      %c0_43 = arith.constant 0 : index
      %c0_44 = arith.constant 0 : index
      %61 = vector.load %arg11[%c0_43, %c0_44] : memref<8x128xf32, #tpu.memory_space<vmem>>, vector<8x128xf32>
      tpu.vector_store %arg11[%c0_43, %c0_44], %60 {strides = array<i32>} : memref<8x128xf32, #tpu.memory_space<vmem>>, vector<8x128xf32>,
    } else {
    }
    %c0 = arith.constant 0 : index
    %c0_1 = arith.constant 0 : index
    %c0_2 = arith.constant 0 : index
    %3 = vector.load %arg2[%c0, %c0_1, %c0_2] : memref<1x32x256xbf16, #tpu.memory_space<vmem>>, vector<1x32x256xbf16>
    %4 = vector.shape_cast %3 : vector<1x32x256xbf16> to vector<32x256xbf16>
    %c0_3 = arith.constant 0 : index
    %c0_4 = arith.constant 0 : index
    %5 = vector.load %arg4[%c0_3, %c0_4] : memref<256x128xbf16, #tpu.memory_space<vmem>>, vector<256x128xbf16>
    %cst = arith.constant dense<0.000000e+00> : vector<32x128xf32>
    %6 = tpu.matmul %4, %5, %cst {dimension_numbers = #tpu.dot_dimension_numbers<[1], [0], [0], [1], [0, 0, 1, 1], [], []>} : vector<32x256xbf16>, vector<256x128xbf16>, vector<32x128xf32> -> vector<32x128xf32>
    %c0_5 = arith.constant 0 : index
    %c0_6 = arith.constant 0 : index
    %7 = vector.load %arg6[%c0_5, %c0_6] : memref<1x128xf32, #tpu.memory_space<vmem>>, vector<1x128xf32>
    %8 = vector.broadcast %7 : vector<1x128xf32> to vector<32x128xf32>
    %9 = arith.addf %6, %8 : vector<32x128xf32>
    %c0_7 = arith.constant 0 : index
    %c0_8 = arith.constant 0 : index
    %10 = vector.load %arg10[%c0_7, %c0_8] : memref<32x128xf32, #tpu.memory_space<vmem>>, vector<32x128xf32>
    tpu.vector_store %arg10[%c0_7, %c0_8], %9 {strides = array<i32>} : memref<32x128xf32, #tpu.memory_space<vmem>>, vector<32x128xf32>,
    %c0_9 = arith.constant 0 : index
    %c0_10 = arith.constant 0 : index
    %11 = vector.load %arg5[%c0_9, %c0_10] : memref<128x128xf32, #tpu.memory_space<vmem>>, vector<128x128xf32>
    %c0_11 = arith.constant 0 : index
    %c0_12 = arith.constant 0 : index
    %12 = vector.load %arg11[%c0_11, %c0_12] : memref<8x128xf32, #tpu.memory_space<vmem>>, vector<8x128xf32>
    %c0_i32_13 = arith.constant 0 : i32
    %c8_i32 = arith.constant 8 : i32
    %13 = arith.muli %c0_i32_13, %c8_i32 : i32
    %14 = tpu.assume_multiple %13, 8 : i32
    %15 = arith.index_cast %14 : i32 to index
    %c0_14 = arith.constant 0 : index
    %16 = vector.load %arg10[%15, %c0_14] : memref<32x128xf32, #tpu.memory_space<vmem>>, vector<8x128xf32>
    %cst_15 = arith.constant dense<0.000000e+00> : vector<8x128xf32>
    %17 = tpu.matmul %12, %11, %cst_15 {dimension_numbers = #tpu.dot_dimension_numbers<[1], [0], [0], [1], [0, 0, 1, 1], [], []>} : vector<8x128xf32>, vector<128x128xf32>, vector<8x128xf32> -> vector<8x128xf32>
    %18 = arith.addf %16, %17 : vector<8x128xf32>
    %19 = math.tanh %18 : vector<8x128xf32>
    %20 = arith.index_cast %14 : i32 to index
    %c0_16 = arith.constant 0 : index
    %21 = vector.load %arg10[%20, %c0_16] : memref<32x128xf32, #tpu.memory_space<vmem>>, vector<8x128xf32>
    tpu.vector_store %arg10[%20, %c0_16], %19 {strides = array<i32>} : memref<32x128xf32, #tpu.memory_space<vmem>>, vector<8x128xf32>,
    %c1_i32 = arith.constant 1 : i32
    %c8_i32_17 = arith.constant 8 : i32
    %22 = arith.muli %c1_i32, %c8_i32_17 : i32
    %23 = tpu.assume_multiple %22, 8 : i32
    %24 = arith.index_cast %23 : i32 to index
    %c0_18 = arith.constant 0 : index
    %25 = vector.load %arg10[%24, %c0_18] : memref<32x128xf32, #tpu.memory_space<vmem>>, vector<8x128xf32>
    %cst_19 = arith.constant dense<0.000000e+00> : vector<8x128xf32>
    %26 = tpu.matmul %19, %11, %cst_19 {dimension_numbers = #tpu.dot_dimension_numbers<[1], [0], [0], [1], [0, 0, 1, 1], [], []>} : vector<8x128xf32>, vector<128x128xf32>, vector<8x128xf32> -> vector<8x128xf32>
    %27 = arith.addf %25, %26 : vector<8x128xf32>
    %28 = math.tanh %27 : vector<8x128xf32>
    %29 = arith.index_cast %23 : i32 to index
    %c0_20 = arith.constant 0 : index
    %30 = vector.load %arg10[%29, %c0_20] : memref<32x128xf32, #tpu.memory_space<vmem>>, vector<8x128xf32>
    tpu.vector_store %arg10[%29, %c0_20], %28 {strides = array<i32>} : memref<32x128xf32, #tpu.memory_space<vmem>>, vector<8x128xf32>,
    %c2_i32 = arith.constant 2 : i32
    %c8_i32_21 = arith.constant 8 : i32
    %31 = arith.muli %c2_i32, %c8_i32_21 : i32
    %32 = tpu.assume_multiple %31, 8 : i32
    %33 = arith.index_cast %32 : i32 to index
    %c0_22 = arith.constant 0 : index
    %34 = vector.load %arg10[%33, %c0_22] : memref<32x128xf32, #tpu.memory_space<vmem>>, vector<8x128xf32>
    %cst_23 = arith.constant dense<0.000000e+00> : vector<8x128xf32>
    %35 = tpu.matmul %28, %11, %cst_23 {dimension_numbers = #tpu.dot_dimension_numbers<[1], [0], [0], [1], [0, 0, 1, 1], [], []>} : vector<8x128xf32>, vector<128x128xf32>, vector<8x128xf32> -> vector<8x128xf32>
    %36 = arith.addf %34, %35 : vector<8x128xf32>
    %37 = math.tanh %36 : vector<8x128xf32>
    %38 = arith.index_cast %32 : i32 to index
    %c0_24 = arith.constant 0 : index
    %39 = vector.load %arg10[%38, %c0_24] : memref<32x128xf32, #tpu.memory_space<vmem>>, vector<8x128xf32>
    tpu.vector_store %arg10[%38, %c0_24], %37 {strides = array<i32>} : memref<32x128xf32, #tpu.memory_space<vmem>>, vector<8x128xf32>,
    %c3_i32 = arith.constant 3 : i32
    %c8_i32_25 = arith.constant 8 : i32
    %40 = arith.muli %c3_i32, %c8_i32_25 : i32
    %41 = tpu.assume_multiple %40, 8 : i32
    %42 = arith.index_cast %41 : i32 to index
    %c0_26 = arith.constant 0 : index
    %43 = vector.load %arg10[%42, %c0_26] : memref<32x128xf32, #tpu.memory_space<vmem>>, vector<8x128xf32>
    %cst_27 = arith.constant dense<0.000000e+00> : vector<8x128xf32>
    %44 = tpu.matmul %37, %11, %cst_27 {dimension_numbers = #tpu.dot_dimension_numbers<[1], [0], [0], [1], [0, 0, 1, 1], [], []>} : vector<8x128xf32>, vector<128x128xf32>, vector<8x128xf32> -> vector<8x128xf32>
    %45 = arith.addf %43, %44 : vector<8x128xf32>
    %46 = math.tanh %45 : vector<8x128xf32>
    %47 = arith.index_cast %41 : i32 to index
    %c0_28 = arith.constant 0 : index
    %48 = vector.load %arg10[%47, %c0_28] : memref<32x128xf32, #tpu.memory_space<vmem>>, vector<8x128xf32>
    tpu.vector_store %arg10[%47, %c0_28], %46 {strides = array<i32>} : memref<32x128xf32, #tpu.memory_space<vmem>>, vector<8x128xf32>,
    %c4_i32 = arith.constant 4 : i32
    %c0_29 = arith.constant 0 : index
    %c0_30 = arith.constant 0 : index
    %49 = vector.load %arg11[%c0_29, %c0_30] : memref<8x128xf32, #tpu.memory_space<vmem>>, vector<8x128xf32>
    tpu.vector_store %arg11[%c0_29, %c0_30], %46 {strides = array<i32>} : memref<8x128xf32, #tpu.memory_space<vmem>>, vector<8x128xf32>,
    %c0_31 = arith.constant 0 : index
    %c0_32 = arith.constant 0 : index
    %50 = vector.load %arg10[%c0_31, %c0_32] : memref<32x128xf32, #tpu.memory_space<vmem>>, vector<32x128xf32>
    %51 = arith.truncf %50 : vector<32x128xf32> to vector<32x128xbf16>
    %c0_33 = arith.constant 0 : index
    %c0_34 = arith.constant 0 : index
    %52 = vector.load %arg7[%c0_33, %c0_34] : memref<128x128xbf16, #tpu.memory_space<vmem>>, vector<128x128xbf16>
    %cst_35 = arith.constant dense<0.000000e+00> : vector<32x128xf32>
    %53 = tpu.matmul %51, %52, %cst_35 {dimension_numbers = #tpu.dot_dimension_numbers<[1], [0], [0], [1], [0, 0, 1, 1], [], []>} : vector<32x128xbf16>, vector<128x128xbf16>, vector<32x128xf32> -> vector<32x128xf32>
    %c0_36 = arith.constant 0 : index
    %c0_37 = arith.constant 0 : index
    %54 = vector.load %arg8[%c0_36, %c0_37] : memref<1x128xf32, #tpu.memory_space<vmem>>, vector<1x128xf32>
    %55 = vector.broadcast %54 : vector<1x128xf32> to vector<32x128xf32>
    %56 = arith.addf %53, %55 : vector<32x128xf32>
    %c0_38 = arith.constant 0 : index
    %c0_39 = arith.constant 0 : index
    %c0_40 = arith.constant 0 : index
    %57 = vector.load %arg9[%c0_38, %c0_39, %c0_40] : memref<1x32x128xf32, #tpu.memory_space<vmem>>, vector<1x32x128xf32>
    %58 = vector.shape_cast %57 : vector<1x32x128xf32> to vector<32x128xf32>
    %59 = vector.shape_cast %56 : vector<32x128xf32> to vector<1x32x128xf32>
    tpu.vector_store %arg9[%c0_38, %c0_39, %c0_40], %59 {strides = array<i32>} : memref<1x32x128xf32, #tpu.memory_space<vmem>>, vector<1x32x128xf32>,
    return
  }
  func.func @transform_0(%arg0: i32, %arg1: i32) -> (i32, i32, i32) {
    %c0_i32 = arith.constant 0 : i32
    %c0_i32_0 = arith.constant 0 : i32
    return %arg0, %arg1, %c0_i32 : i32, i32, i32
  }
  func.func @transform_1(%arg0: i32, %arg1: i32) -> (i32, i32) {
    %c0_i32 = arith.constant 0 : i32
    %c0_i32_0 = arith.constant 0 : i32
    return %arg0, %c0_i32 : i32, i32
  }
  func.func @transform_2(%arg0: i32, %arg1: i32) -> (i32, i32) {
    %c0_i32 = arith.constant 0 : i32
    %c0_i32_0 = arith.constant 0 : i32
    %c0_i32_1 = arith.constant 0 : i32
    return %c0_i32, %c0_i32_0 : i32, i32
  }
  func.func @transform_3(%arg0: i32, %arg1: i32) -> (i32, i32) {
    %c0_i32 = arith.constant 0 : i32
    %c0_i32_0 = arith.constant 0 : i32
    %c0_i32_1 = arith.constant 0 : i32
    return %c0_i32, %c0_i32_0 : i32, i32
  }
  func.func @transform_4(%arg0: i32, %arg1: i32) -> (i32, i32) {
    %c0_i32 = arith.constant 0 : i32
    %c0_i32_0 = arith.constant 0 : i32
    %c0_i32_1 = arith.constant 0 : i32
    return %c0_i32, %c0_i32_0 : i32, i32
  }
  func.func @transform_5(%arg0: i32, %arg1: i32) -> (i32, i32) {
    %c0_i32 = arith.constant 0 : i32
    %c0_i32_0 = arith.constant 0 : i32
    %c0_i32_1 = arith.constant 0 : i32
    return %c0_i32, %c0_i32_0 : i32, i32
  }
  func.func @transform_6(%arg0: i32, %arg1: i32) -> (i32, i32) {
    %c0_i32 = arith.constant 0 : i32
    %c0_i32_0 = arith.constant 0 : i32
    %c0_i32_1 = arith.constant 0 : i32
    return %c0_i32, %c0_i32_0 : i32, i32
  }
  func.func @transform_7(%arg0: i32, %arg1: i32) -> (i32, i32, i32) {
    %c0_i32 = arith.constant 0 : i32
    %c0_i32_0 = arith.constant 0 : i32
    return %arg0, %arg1, %c0_i32 : i32, i32, i32
  }
}

</mosaic_0001>

<llo_original>
// kernel: tpu_custom_call.1
$region0: #{tpu_custom_call.1}
  #allocation0 [shape = 'u32[]', space=smem, size = 0x4, offset = 0x4, fixed_abs, tag = 'smem constant byte address 0x4 - core index']
  #allocation1 [shape = 'u32[144,128]{1,0:T(1,128)}', space=vmem, size = 0x12000, scoped, tag = 'internal scratch']
  #allocation2 [shape = 'f32[32,128]{1,0:T(8,128)}', space=vmem, size = 0x4000, scoped, tag = 'scratch operand']
  #allocation3 [shape = 'f32[8,128]{1,0:T(8,128)}', space=vmem, size = 0x1000, scoped, tag = 'scratch operand']
  %s0 = inlined_call_operand.hbm [shape: bf16[1,64,256], index: 0, kind: input, shape index: {}]
  %s1 = inlined_call_operand.hbm [shape: f32[8,128], index: 1, kind: input, shape index: {}]
  %s2 = inlined_call_operand.hbm [shape: bf16[256,128], index: 2, kind: input, shape index: {}]
  %s3 = inlined_call_operand.hbm [shape: f32[128,128], index: 3, kind: input, shape index: {}]
  %s4 = inlined_call_operand.vmem [shape: f32[1,128], index: 4, kind: input, shape index: {}]
  %s5 = inlined_call_operand.hbm [shape: bf16[128,128], index: 5, kind: input, shape index: {}]
  %s6 = inlined_call_operand.vmem [shape: f32[1,128], index: 6, kind: input, shape index: {}]
  %s7 = inlined_call_operand.hbm [shape: f32[1,64,128], index: 7, kind: output, shape index: {}]
  %s8 = sld [smem:[#allocation0]]
  $region85: #{tpu_custom_call.1} parent=0
    _
  %s10 = ssub.s32 1, %s8
  %s11 = scalar_select 0, %s10, %s8
  $region1: #{tpu_custom_call.1} parent=0
    #allocation4 [shape = 'u8[32768]{0}', space=vmem, size = 0x8000, scoped, tag = 'input window, operand 0']
    #allocation5 [shape = 's32[2]{0}', space=sflag, size = 0x8, scoped, tag = 'scoped memory for tpu_custom_call.1']
    #allocation6 [shape = 's32[2]{0}', space=sflag, size = 0x8, scoped, tag = 'scoped memory for tpu_custom_call.1']
    #allocation7 [shape = 'u8[4096]{0}', space=vmem, size = 0x1000, scoped, tag = 'input window, operand 1, single buffered']
    #allocation8 [shape = 's32[1]{0}', space=sflag, size = 0x4, scoped, tag = 'scoped memory for tpu_custom_call.1']
    #allocation9 [shape = 'u8[65536]{0}', space=vmem, size = 0x10000, scoped, tag = 'input window, operand 2, single buffered']
    #allocation10 [shape = 'u8[65536]{0}', space=vmem, size = 0x10000, scoped, tag = 'input window, operand 3, single buffered']
    #allocation11 [shape = 's32[1]{0}', space=sflag, size = 0x4, scoped, tag = 'scoped memory for tpu_custom_call.1']
    #allocation12 [shape = 'u8[32768]{0}', space=vmem, size = 0x8000, scoped, tag = 'input window, operand 5, single buffered']
    #allocation13 [shape = 'u8[32768]{0}', space=vmem, size = 0x8000, scoped, tag = 'output window, operand 0']
    %12 = vsyncpa [#allocation5], 0
    %s13 = scalar_lea.sflag [#allocation5], 1
    %14 = vsyncpa %s13, 0
    %15 = vsyncpa [#allocation8], 0
    %16 = vsyncpa [#allocation11], 0
    %17 = vsyncpa [#allocation6], 0
    %s18 = scalar_lea.sflag [#allocation6], 1
    %19 = vsyncpa %s18, 0
    loop: start=0, step=1, limit=4
    $region2: #{tpu_custom_call.1} parent=1 // loop_pre_header
      _
    $region3: #{tpu_custom_call.1} parent=1 // loop_header
      %s21 = sphi 0, %s25
      %p22 = scmp.ge.s32.totalorder %s21, 4
      %s28 = sphi 0, %s40
      %s29 = sphi 0, %s36
      %s30 = sphi 0, %s28
      %s31 = sphi 0, %s29
      %s32 = sphi 0, %s30
      %s33 = sphi 0, %s31
      %s45 = sphi 0, %s47
      %s48 = sphi 0, %s45
      %s49 = sphi 0, %s48
      %s65 = sphi 0, %s49
      %s71 = sphi 0, %s73
      %s74 = sphi 0, %s71
      %s75 = sphi 0, %s74
      %s91 = sphi 0, %s75
      %s95 = sphi 0, %s95
      %s97 = sphi 0, %s95
      %s98 = sphi 0, %s97
      %s112 = sphi 0, %s98
      %s116 = sphi 0, %s116
      %s118 = sphi 0, %s116
      %s119 = sphi 0, %s118
      %s133 = sphi 0, %s119
      %s137 = sphi 0, %s137
      %s139 = sphi 0, %s137
      %s140 = sphi 0, %s139
      %s154 = sphi 0, %s140
      %s158 = sphi 0, %s158
      %s160 = sphi 0, %s158
      %s161 = sphi 0, %s160
      %s175 = sphi 0, %s161
      %s179 = sphi 0, %s179
      %s181 = sphi 0, %s179
      %s182 = sphi 0, %s181
      %s196 = sphi 0, %s182
      %s204 = sphi 0, %s206
      %s207 = sphi 0, %s204
      %s208 = sphi 0, %s207
      %s224 = sphi 0, %s208
    $region4: #{tpu_custom_call.1} parent=1 // loop_header_branch
      %24 = sbr.rel (%p22) target = $region8
    $region5: #{tpu_custom_call.1} parent=1 // loop_body
      %s26 = ssub.s32 %s21, 1
      %s27 = ssub.s32 %s21, 2
      %s34 = sadd.s32 1, %s29
      %p35 = scmp.ge.s32.totalorder %s34, 2
      %s36 = scalar_select %p35, 0, %s34
      %s37 = sadd.s32 1, %s28
      %s38 = scalar_select %p35, %s37, %s28
      %p39 = scmp.ge.s32.totalorder %s38, 1
      %s40 = scalar_select %p39, 0, %s38
      %s41 = ssub.s32 %s28, %s40
      %s42 = ssub.s32 %s29, %s36
      %s43 = sor.u32 %s41, %s42
      %p44 = scmp.eq.s32.totalorder %s43, 0
      %s46 = sadd.s32 %s45, 1
      %s47 = scalar_select %p44, %s45, %s46
      %p50 = pneg %p44
      %p51 = scmp.eq.s32.totalorder %s21, 1
      %p52 = por %p50, %p51
      %p53 = scmp.ne.s32.totalorder %s45, %s48
      %p54 = scmp.eq.s32.totalorder %s21, 0
      %p55 = por %p53, %p54
      %p56 = scmp.ne.s32.totalorder %s45, %s48
      %p57 = scmp.eq.s32.totalorder %s26, 1
      %p58 = por %p56, %p57
      %p59 = scmp.ne.s32.totalorder %s48, %s49
      %p60 = scmp.eq.s32.totalorder %s26, 0
      %p61 = por %p59, %p60
      %p62 = scmp.ne.s32.totalorder %s48, %s49
      %p63 = scmp.eq.s32.totalorder %s27, 1
      %p64 = por %p62, %p63
      %p66 = scmp.ne.s32.totalorder %s49, %s65
      %p67 = scmp.eq.s32.totalorder %s27, 0
      %p68 = por %p66, %p67
      %s69 = ssub.s32 %s28, %s40
      %p70 = scmp.eq.s32.totalorder %s69, 0
      %s72 = sadd.s32 %s71, 1
      %s73 = scalar_select %p70, %s71, %s72
      %p76 = pneg %p70
      %p77 = scmp.eq.s32.totalorder %s21, 1
      %p78 = por %p76, %p77
      %p79 = scmp.ne.s32.totalorder %s71, %s74
      %p80 = scmp.eq.s32.totalorder %s21, 0
      %p81 = por %p79, %p80
      %p82 = scmp.ne.s32.totalorder %s71, %s74
      %p83 = scmp.eq.s32.totalorder %s26, 1
      %p84 = por %p82, %p83
      %p85 = scmp.ne.s32.totalorder %s74, %s75
      %p86 = scmp.eq.s32.totalorder %s26, 0
      %p87 = por %p85, %p86
      %p88 = scmp.ne.s32.totalorder %s74, %s75
      %p89 = scmp.eq.s32.totalorder %s27, 1
      %p90 = por %p88, %p89
      %p92 = scmp.ne.s32.totalorder %s75, %s91
      %p93 = scmp.eq.s32.totalorder %s27, 0
      %p94 = por %p92, %p93
      %s96 = sadd.s32 %s95, 1
      %p99 = scmp.eq.s32.totalorder %s21, 1
      %p100 = scmp.ne.s32.totalorder %s95, %s97
      %p101 = scmp.eq.s32.totalorder %s21, 0
      %p102 = por %p100, %p101
      %p103 = scmp.ne.s32.totalorder %s95, %s97
      %p104 = scmp.eq.s32.totalorder %s26, 1
      %p105 = por %p103, %p104
      %p106 = scmp.ne.s32.totalorder %s97, %s98
      %p107 = scmp.eq.s32.totalorder %s26, 0
      %p108 = por %p106, %p107
      %p109 = scmp.ne.s32.totalorder %s97, %s98
      %p110 = scmp.eq.s32.totalorder %s27, 1
      %p111 = por %p109, %p110
      %p113 = scmp.ne.s32.totalorder %s98, %s112
      %p114 = scmp.eq.s32.totalorder %s27, 0
      %p115 = por %p113, %p114
      %s117 = sadd.s32 %s116, 1
      %p120 = scmp.eq.s32.totalorder %s21, 1
      %p121 = scmp.ne.s32.totalorder %s116, %s118
      %p122 = scmp.eq.s32.totalorder %s21, 0
      %p123 = por %p121, %p122
      %p124 = scmp.ne.s32.totalorder %s116, %s118
      %p125 = scmp.eq.s32.totalorder %s26, 1
      %p126 = por %p124, %p125
      %p127 = scmp.ne.s32.totalorder %s118, %s119
      %p128 = scmp.eq.s32.totalorder %s26, 0
      %p129 = por %p127, %p128
      %p130 = scmp.ne.s32.totalorder %s118, %s119
      %p131 = scmp.eq.s32.totalorder %s27, 1
      %p132 = por %p130, %p131
      %p134 = scmp.ne.s32.totalorder %s119, %s133
      %p135 = scmp.eq.s32.totalorder %s27, 0
      %p136 = por %p134, %p135
      %s138 = sadd.s32 %s137, 1
      %p141 = scmp.eq.s32.totalorder %s21, 1
      %p142 = scmp.ne.s32.totalorder %s137, %s139
      %p143 = scmp.eq.s32.totalorder %s21, 0
      %p144 = por %p142, %p143
      %p145 = scmp.ne.s32.totalorder %s137, %s139
      %p146 = scmp.eq.s32.totalorder %s26, 1
      %p147 = por %p145, %p146
      %p148 = scmp.ne.s32.totalorder %s139, %s140
      %p149 = scmp.eq.s32.totalorder %s26, 0
      %p150 = por %p148, %p149
      %p151 = scmp.ne.s32.totalorder %s139, %s140
      %p152 = scmp.eq.s32.totalorder %s27, 1
      %p153 = por %p151, %p152
      %p155 = scmp.ne.s32.totalorder %s140, %s154
      %p156 = scmp.eq.s32.totalorder %s27, 0
      %p157 = por %p155, %p156
      %s159 = sadd.s32 %s158, 1
      %p162 = scmp.eq.s32.totalorder %s21, 1
      %p163 = scmp.ne.s32.totalorder %s158, %s160
      %p164 = scmp.eq.s32.totalorder %s21, 0
      %p165 = por %p163, %p164
      %p166 = scmp.ne.s32.totalorder %s158, %s160
      %p167 = scmp.eq.s32.totalorder %s26, 1
      %p168 = por %p166, %p167
      %p169 = scmp.ne.s32.totalorder %s160, %s161
      %p170 = scmp.eq.s32.totalorder %s26, 0
      %p171 = por %p169, %p170
      %p172 = scmp.ne.s32.totalorder %s160, %s161
      %p173 = scmp.eq.s32.totalorder %s27, 1
      %p174 = por %p172, %p173
      %p176 = scmp.ne.s32.totalorder %s161, %s175
      %p177 = scmp.eq.s32.totalorder %s27, 0
      %p178 = por %p176, %p177
      %s180 = sadd.s32 %s179, 1
      %p183 = scmp.eq.s32.totalorder %s21, 1
      %p184 = scmp.ne.s32.totalorder %s179, %s181
      %p185 = scmp.eq.s32.totalorder %s21, 0
      %p186 = por %p184, %p185
      %p187 = scmp.ne.s32.totalorder %s179, %s181
      %p188 = scmp.eq.s32.totalorder %s26, 1
      %p189 = por %p187, %p188
      %p190 = scmp.ne.s32.totalorder %s181, %s182
      %p191 = scmp.eq.s32.totalorder %s26, 0
      %p192 = por %p190, %p191
      %p193 = scmp.ne.s32.totalorder %s181, %s182
      %p194 = scmp.eq.s32.totalorder %s27, 1
      %p195 = por %p193, %p194
      %p197 = scmp.ne.s32.totalorder %s182, %s196
      %p198 = scmp.eq.s32.totalorder %s27, 0
      %p199 = por %p197, %p198
      %s200 = ssub.s32 %s28, %s40
      %s201 = ssub.s32 %s29, %s36
      %s202 = sor.u32 %s200, %s201
      %p203 = scmp.eq.s32.totalorder %s202, 0
      %s205 = sadd.s32 %s204, 1
      %s206 = scalar_select %p203, %s204, %s205
      %p209 = pneg %p203
      %p210 = scmp.eq.s32.totalorder %s21, 1
      %p211 = por %p209, %p210
      %p212 = scmp.ne.s32.totalorder %s204, %s207
      %p213 = scmp.eq.s32.totalorder %s21, 0
      %p214 = por %p212, %p213
      %p215 = scmp.ne.s32.totalorder %s204, %s207
      %p216 = scmp.eq.s32.totalorder %s26, 1
      %p217 = por %p215, %p216
      %p218 = scmp.ne.s32.totalorder %s207, %s208
      %p219 = scmp.eq.s32.totalorder %s26, 0
      %p220 = por %p218, %p219
      %p221 = scmp.ne.s32.totalorder %s207, %s208
      %p222 = scmp.eq.s32.totalorder %s27, 1
      %p223 = por %p221, %p222
      %p225 = scmp.ne.s32.totalorder %s208, %s224
      %p226 = scmp.eq.s32.totalorder %s27, 0
      %p227 = por %p225, %p226
      %p228 = scmp.le.s32.totalorder 1, %s21
      %p229 = scmp.lt.s32.totalorder %s21, 3
      %p230 = pnand %p228, %p229
      %p231 = pneg %p230
      // Predicated region
      $region9: #{tpu_custom_call.1} parent=5 // pred_check
        _
      $region10: #{tpu_custom_call.1} parent=5 // pred_check_branch
        %233 = sbr.rel (%p230) target = $region12
      $region11: #{tpu_custom_call.1} parent=5 // pred_region
        %s234 = ssub.s32 %s21, 1
        // Predicated region
        $region13: #{tpu_custom_call.1} parent=11 // pred_check
          %p235 = pneg %p87
        $region14: #{tpu_custom_call.1} parent=11 // pred_check_branch
          %237 = sbr.rel (%p235) target = $region16
        $region15: #{tpu_custom_call.1} parent=11 // pred_region
          %s239 = ssub.s32 128, 128
          %240 = vsyncadd [#allocation8], %s239
          %s241 = smul.addr %s30, 128
          %s242 = scalar_lea.hbm %s1, %s241
          %s244 = sshll.u32 [#allocation7], 4
          %s245 = int_to_ptr.vmem [resolvable:$true] %s244
          %247 = dma.hbm_to_vmem [thread:$0]  %s242, 128, %s245, [#allocation8]
        $region16: #{tpu_custom_call.1} parent=11 // pred_fallthru
          _
        // Predicated region
        $region17: #{tpu_custom_call.1} parent=11 // pred_check
          %p248 = pneg %p108
        $region18: #{tpu_custom_call.1} parent=11 // pred_check_branch
          %250 = sbr.rel (%p248) target = $region20
        $region19: #{tpu_custom_call.1} parent=11 // pred_region
          %s252 = ssub.s32 2048, 2048
          %253 = vsyncadd [#allocation8], %s252
          %s254 = sshll.u32 [#allocation9], 4
          %s255 = int_to_ptr.vmem [resolvable:$true] %s254
          %260 = dma.hbm_to_vmem [thread:$0]  %s2, 2048, %s255, [#allocation8], 64, 64, 4
        $region20: #{tpu_custom_call.1} parent=11 // pred_fallthru
          _
        // Predicated region
        $region21: #{tpu_custom_call.1} parent=11 // pred_check
          %p261 = pneg %p129
        $region22: #{tpu_custom_call.1} parent=11 // pred_check_branch
          %263 = sbr.rel (%p261) target = $region24
        $region23: #{tpu_custom_call.1} parent=11 // pred_region
          %s265 = ssub.s32 2048, 2048
          %266 = vsyncadd [#allocation11], %s265
          %s267 = sshll.u32 [#allocation10], 4
          %s268 = int_to_ptr.vmem [resolvable:$true] %s267
          %273 = dma.hbm_to_vmem [thread:$0]  %s3, 2048, %s268, [#allocation11], 128, 128, 8
        $region24: #{tpu_custom_call.1} parent=11 // pred_fallthru
          _
        // Predicated region
        $region25: #{tpu_custom_call.1} parent=11 // pred_check
          %p274 = pneg %p150
        $region26: #{tpu_custom_call.1} parent=11 // pred_check_branch
          %276 = sbr.rel (%p274) target = $region28
        $region27: #{tpu_custom_call.1} parent=11 // pred_region
          _
        $region28: #{tpu_custom_call.1} parent=11 // pred_fallthru
          _
        // Predicated region
        $region29: #{tpu_custom_call.1} parent=11 // pred_check
          %p277 = pneg %p171
        $region30: #{tpu_custom_call.1} parent=11 // pred_check_branch
          %279 = sbr.rel (%p277) target = $region32
        $region31: #{tpu_custom_call.1} parent=11 // pred_region
          %s281 = ssub.s32 1024, 1024
          %282 = vsyncadd [#allocation11], %s281
          %s283 = sshll.u32 [#allocation12], 4
          %s284 = int_to_ptr.vmem [resolvable:$true] %s283
          %289 = dma.hbm_to_vmem [thread:$0]  %s5, 1024, %s284, [#allocation11], 64, 64, 4
        $region32: #{tpu_custom_call.1} parent=11 // pred_fallthru
          _
        // Predicated region
        $region33: #{tpu_custom_call.1} parent=11 // pred_check
          %p290 = pneg %p192
        $region34: #{tpu_custom_call.1} parent=11 // pred_check_branch
          %292 = sbr.rel (%p290) target = $region36
        $region35: #{tpu_custom_call.1} parent=11 // pred_region
          _
        $region36: #{tpu_custom_call.1} parent=11 // pred_fallthru
          _
      $region12: #{tpu_custom_call.1} parent=5 // pred_fallthru
        _
      %p293 = scmp.lt.s32.totalorder %s21, 2
      // Predicated region
      $region37: #{tpu_custom_call.1} parent=5 // pred_check
        %p294 = pneg %p293
      $region38: #{tpu_custom_call.1} parent=5 // pred_check_branch
        %296 = sbr.rel (%p294) target = $region40
      $region39: #{tpu_custom_call.1} parent=5 // pred_region
        // Predicated region
        $region41: #{tpu_custom_call.1} parent=39 // pred_check
          %p297 = pneg %p55
        $region42: #{tpu_custom_call.1} parent=39 // pred_check_branch
          %299 = sbr.rel (%p297) target = $region44
        $region43: #{tpu_custom_call.1} parent=39 // pred_region
          %s300 = sand.u32 %s45, 1
          %s301 = scalar_lea.sflag [#allocation5], %s300
          %s302 = sand.u32 %s45, 1
          %s303 = smul.addr %s302, 32
          %s304 = scalar_lea.vmem [#allocation4], %s303
          %s305 = smul.u32 4, %s29
          %s307 = ssub.s32 512, 512
          %308 = vsyncadd %s301, %s307
          %s309 = smul.addr %s305, 2
          %s310 = smul.addr %s28, 16
          %s311 = sadd.s32 %s309, %s310
          %s312 = smul.addr %s311, 64
          %s313 = scalar_lea.hbm %s0, %s312
          %s314 = sshll.u32 %s304, 4
          %s315 = int_to_ptr.vmem [resolvable:$true] %s314
          %320 = dma.hbm_to_vmem [thread:$0]  %s313, 512, %s315, %s301, 128, 128, 8
        $region44: #{tpu_custom_call.1} parent=39 // pred_fallthru
          _
      $region40: #{tpu_custom_call.1} parent=5 // pred_fallthru
        _
      %p321 = scmp.le.s32.totalorder 1, %s21
      %p322 = scmp.lt.s32.totalorder %s21, 3
      %p323 = pnand %p321, %p322
      %p324 = pneg %p323
      // Predicated region
      $region45: #{tpu_custom_call.1} parent=5 // pred_check
        _
      $region46: #{tpu_custom_call.1} parent=5 // pred_check_branch
        %326 = sbr.rel (%p323) target = $region48
      $region47: #{tpu_custom_call.1} parent=5 // pred_region
        %s327 = ssub.s32 %s21, 1
        %s328 = sand.u32 %s48, 1
        %s329 = scalar_lea.sflag [#allocation5], %s328
        %s330 = sand.u32 %s48, 1
        %s331 = smul.addr %s330, 32
        %s332 = scalar_lea.vmem [#allocation4], %s331
        // Predicated region
        $region49: #{tpu_custom_call.1} parent=47 // pred_check
          %p333 = pneg %p61
        $region50: #{tpu_custom_call.1} parent=47 // pred_check_branch
          %335 = sbr.rel (%p333) target = $region52
        $region51: #{tpu_custom_call.1} parent=47 // pred_region
          %336 = dma.done %s329, 512
        $region52: #{tpu_custom_call.1} parent=47 // pred_fallthru
          _
        // Predicated region
        $region53: #{tpu_custom_call.1} parent=47 // pred_check
          %p337 = pneg %p87
        $region54: #{tpu_custom_call.1} parent=47 // pred_check_branch
          %339 = sbr.rel (%p337) target = $region56
        $region55: #{tpu_custom_call.1} parent=47 // pred_region
          %340 = dma.done [#allocation8], 128
        $region56: #{tpu_custom_call.1} parent=47 // pred_fallthru
          _
        // Predicated region
        $region57: #{tpu_custom_call.1} parent=47 // pred_check
          %p341 = pneg %p108
        $region58: #{tpu_custom_call.1} parent=47 // pred_check_branch
          %343 = sbr.rel (%p341) target = $region60
        $region59: #{tpu_custom_call.1} parent=47 // pred_region
          %344 = dma.done [#allocation8], 2048
        $region60: #{tpu_custom_call.1} parent=47 // pred_fallthru
          _
        // Predicated region
        $region61: #{tpu_custom_call.1} parent=47 // pred_check
          %p345 = pneg %p129
        $region62: #{tpu_custom_call.1} parent=47 // pred_check_branch
          %347 = sbr.rel (%p345) target = $region64
        $region63: #{tpu_custom_call.1} parent=47 // pred_region
          %348 = dma.done [#allocation11], 2048
        $region64: #{tpu_custom_call.1} parent=47 // pred_fallthru
          _
        // Predicated region
        $region65: #{tpu_custom_call.1} parent=47 // pred_check
          %p349 = pneg %p171
        $region66: #{tpu_custom_call.1} parent=47 // pred_check_branch
          %351 = sbr.rel (%p349) target = $region68
        $region67: #{tpu_custom_call.1} parent=47 // pred_region
          %352 = dma.done [#allocation11], 1024
        $region68: #{tpu_custom_call.1} parent=47 // pred_fallthru
          _
        %s353 = sand.u32 %s48, 1
        %s354 = scalar_lea.sflag [#allocation5], %s353
        %s355 = sand.u32 %s48, 1
        %s356 = smul.addr %s355, 32
        %s357 = scalar_lea.vmem [#allocation4], %s356
        %p358 = pneg %p61
        %p359 = pneg %p58
        %p360 = pneg %p87
        %p361 = pneg %p84
        %p362 = pneg %p108
        %p363 = pneg %p105
        %p364 = pneg %p129
        %p365 = pneg %p126
        %p366 = pneg %p150
        %p367 = pneg %p147
        %p368 = pneg %p171
        %p369 = pneg %p168
        %p370 = pneg %p192
        %p371 = pneg %p189
        %p372 = pneg %p220
        %p373 = pneg %p217
        %s374 = sand.u32 %s207, 1
        %s375 = scalar_lea.sflag [#allocation6], %s374
        %s376 = sand.u32 %s207, 1
        %s377 = smul.addr %s376, 32
        %s378 = scalar_lea.vmem [#allocation13], %s377
        %s379 = smul.u32 4, %s31
        %s380 = smul.u32 4, %s31
        %p382 = scmp.eq.s32.totalorder %s31, 0
        // Predicated region
        $region69: #{tpu_custom_call.1} parent=47 // pred_check
          %p383 = pneg %p382
        $region70: #{tpu_custom_call.1} parent=47 // pred_check_branch
          %385 = sbr.rel (%p383) target = $region72
        $region71: #{tpu_custom_call.1} parent=47 // pred_region
          %v386 = vld [vmem:[#allocation7] sm:$0xff]
          %387 = vst [vmem:[#allocation3] sm:$0xff] %v386
        $region72: #{tpu_custom_call.1} parent=47 // pred_fallthru
          _
        %v388 = vld [vmem:[%s332] sm:$0xff]
        %v389 = vld [vmem:[%s332 + $0x8] sm:$0xff]
        %v390 = vld [vmem:[%s332 + $0x10] sm:$0xff]
        %v391 = vld [vmem:[%s332 + $0x18] sm:$0xff]
        %v392 = vld [vmem:[#allocation9] sm:$0xf]
        %v393 = vld [vmem:[#allocation9 + $0x4] sm:$0xf]
        %v394 = vld [vmem:[#allocation9 + $0x8] sm:$0xf]
        %v395 = vld [vmem:[#allocation9 + $0xc] sm:$0xf]
        %v396 = vld [vmem:[#allocation9 + $0x10] sm:$0xf]
        %v397 = vld [vmem:[#allocation9 + $0x14] sm:$0xf]
        %v398 = vld [vmem:[#allocation9 + $0x18] sm:$0xf]
        %v399 = vld [vmem:[#allocation9 + $0x1c] sm:$0xf]
        %v400 = vld [vmem:[#allocation9 + $0x20] sm:$0xf]
        %v401 = vld [vmem:[#allocation9 + $0x24] sm:$0xf]
        %v402 = vld [vmem:[#allocation9 + $0x28] sm:$0xf]
        %v403 = vld [vmem:[#allocation9 + $0x2c] sm:$0xf]
        %v404 = vld [vmem:[#allocation9 + $0x30] sm:$0xf]
        %v405 = vld [vmem:[#allocation9 + $0x34] sm:$0xf]
        %v406 = vld [vmem:[#allocation9 + $0x38] sm:$0xf]
        %v407 = vld [vmem:[#allocation9 + $0x3c] sm:$0xf]
        %v408 = vld [vmem:[#allocation9 + $0x40] sm:$0xf]
        %v409 = vld [vmem:[#allocation9 + $0x44] sm:$0xf]
        %v410 = vld [vmem:[#allocation9 + $0x48] sm:$0xf]
        %v411 = vld [vmem:[#allocation9 + $0x4c] sm:$0xf]
        %v412 = vld [vmem:[#allocation9 + $0x50] sm:$0xf]
        %v413 = vld [vmem:[#allocation9 + $0x54] sm:$0xf]
        %v414 = vld [vmem:[#allocation9 + $0x58] sm:$0xf]
        %v415 = vld [vmem:[#allocation9 + $0x5c] sm:$0xf]
        %v416 = vld [vmem:[#allocation9 + $0x60] sm:$0xf]
        %v417 = vld [vmem:[#allocation9 + $0x64] sm:$0xf]
        %v418 = vld [vmem:[#allocation9 + $0x68] sm:$0xf]
        %v419 = vld [vmem:[#allocation9 + $0x6c] sm:$0xf]
        %v420 = vld [vmem:[#allocation9 + $0x70] sm:$0xf]
        %v421 = vld [vmem:[#allocation9 + $0x74] sm:$0xf]
        %v422 = vld [vmem:[#allocation9 + $0x78] sm:$0xf]
        %v423 = vld [vmem:[#allocation9 + $0x7c] sm:$0xf]
        %v424 = vld [vmem:[%s4] sm:$0x1]
        %v426 = vlaneseq
        %v427 = vshrl.u32 %v426, 7
        %v428 = vsub.s32 0, %v427
        %v429 = vrot.slane %v424, %v428
        %v435 = vunpack.c.l.b16 %v388
        %v436 = vunpack.c.h.b16 %v388
        %v437 = vunpack.c.l.b16 %v389
        %v438 = vunpack.c.h.b16 %v389
        %v439 = vunpack.c.l.b16 %v390
        %v440 = vunpack.c.h.b16 %v390
        %v441 = vunpack.c.l.b16 %v391
        %v442 = vunpack.c.h.b16 %v391
        %v443 = vpack.c.b16 %v437, %v435
        %v444 = vpack.c.b16 %v438, %v436
        %v445 = vpack.c.b16 %v441, %v439
        %v446 = vpack.c.b16 %v442, %v440
        %v483 = vunpack.c.l.b16 %v392
        %v484 = vunpack.c.l.b16 %v393
        %v485 = vunpack.c.l.b16 %v394
        %v486 = vunpack.c.l.b16 %v395
        %v487 = vunpack.c.l.b16 %v396
        %v488 = vunpack.c.l.b16 %v397
        %v489 = vunpack.c.l.b16 %v398
        %v490 = vunpack.c.l.b16 %v399
        %v491 = vunpack.c.l.b16 %v400
        %v492 = vunpack.c.l.b16 %v401
        %v493 = vunpack.c.l.b16 %v402
        %v494 = vunpack.c.l.b16 %v403
        %v495 = vunpack.c.l.b16 %v404
        %v496 = vunpack.c.l.b16 %v405
        %v497 = vunpack.c.l.b16 %v406
        %v498 = vunpack.c.l.b16 %v407
        %v499 = vunpack.c.l.b16 %v408
        %v500 = vunpack.c.l.b16 %v409
        %v501 = vunpack.c.l.b16 %v410
        %v502 = vunpack.c.l.b16 %v411
        %v503 = vunpack.c.l.b16 %v412
        %v504 = vunpack.c.l.b16 %v413
        %v505 = vunpack.c.l.b16 %v414
        %v506 = vunpack.c.l.b16 %v415
        %v507 = vunpack.c.l.b16 %v416
        %v508 = vunpack.c.l.b16 %v417
        %v509 = vunpack.c.l.b16 %v418
        %v510 = vunpack.c.l.b16 %v419
        %v511 = vunpack.c.l.b16 %v420
        %v512 = vunpack.c.l.b16 %v421
        %v513 = vunpack.c.l.b16 %v422
        %v514 = vunpack.c.l.b16 %v423
        %v515 = vpack.c.b16 %v484, %v483
        %v516 = vpack.c.b16 %v486, %v485
        %v517 = vpack.c.b16 %v488, %v487
        %v518 = vpack.c.b16 %v490, %v489
        %v519 = vpack.c.b16 %v492, %v491
        %v520 = vpack.c.b16 %v494, %v493
        %v521 = vpack.c.b16 %v496, %v495
        %v522 = vpack.c.b16 %v498, %v497
        %v523 = vpack.c.b16 %v500, %v499
        %v524 = vpack.c.b16 %v502, %v501
        %v525 = vpack.c.b16 %v504, %v503
        %v526 = vpack.c.b16 %v506, %v505
        %v527 = vpack.c.b16 %v508, %v507
        %v528 = vpack.c.b16 %v510, %v509
        %v529 = vpack.c.b16 %v512, %v511
        %v530 = vpack.c.b16 %v514, %v513
        %547 = vmatprep.subr.bf16.mxu0 0
        %548 = vmatpush1.bf16.msra.mxu0 %v515
        %549 = vmatprep.subr.bf16.mxu0 0
        %550 = vmatpush1.bf16.msra.mxu0 %v516
        %551 = vmatprep.subr.bf16.mxu0 0
        %552 = vmatpush1.bf16.msra.mxu0 %v517
        %553 = vmatprep.subr.bf16.mxu0 0
        %554 = vmatpush1.bf16.msra.mxu0 %v518
        %555 = vmatprep.subr.bf16.mxu0 0
        %556 = vmatpush1.bf16.msra.mxu0 %v519
        %557 = vmatprep.subr.bf16.mxu0 0
        %558 = vmatpush1.bf16.msra.mxu0 %v520
        %559 = vmatprep.subr.bf16.mxu0 0
        %560 = vmatpush1.bf16.msra.mxu0 %v521
        %561 = vmatprep.subr.bf16.mxu0 0
        %562 = vmatpush1.bf16.msra.mxu0 %v522
        %563 = vmatprep.subr.bf16.mxu0 0
        %564 = vmatpush1.bf16.msra.mxu0 %v523
        %565 = vmatprep.subr.bf16.mxu0 0
        %566 = vmatpush1.bf16.msra.mxu0 %v524
        %567 = vmatprep.subr.bf16.mxu0 0
        %568 = vmatpush1.bf16.msra.mxu0 %v525
        %569 = vmatprep.subr.bf16.mxu0 0
        %570 = vmatpush1.bf16.msra.mxu0 %v526
        %571 = vmatprep.subr.bf16.mxu0 0
        %572 = vmatpush1.bf16.msra.mxu0 %v527
        %573 = vmatprep.subr.bf16.mxu0 0
        %574 = vmatpush1.bf16.msra.mxu0 %v528
        %575 = vmatprep.subr.bf16.mxu0 0
        %576 = vmatpush1.bf16.msra.mxu0 %v529
        %577 = vmatprep.subr.bf16.mxu0 0
        %578 = vmatpush1.bf16.msra.mxu0 %v530
        %579 = vmatprep.mubr.bf16.mxu0 %v444
        %580 = vmatmul.mubr.bf16.gmra.mrb[0].mxu0 %v443
        %v581 = vpop.f32.mrb[0].mxu0
        %v582 = vadd.f32 %v429, %v581
        %v583 = vpop.f32.mrb[0].mxu0
        %v584 = vpop.f32.mrb[0].mxu0
        %v585 = vadd.f32 %v429, %v584
        %v586 = vpop.f32.mrb[0].mxu0
        %587 = vmatprep.mubr.bf16.mxu0 %v446
        %588 = vmatmul.mubr.bf16.gmra.mrb[0].mxu0 %v445
        %v589 = vpop.f32.mrb[0].mxu0
        %v590 = vadd.f32 %v429, %v589
        %v591 = vpop.f32.mrb[0].mxu0
        %v592 = vpop.f32.mrb[0].mxu0
        %v593 = vadd.f32 %v429, %v592
        %v594 = vpop.f32.mrb[0].mxu0
        %595 = vdwg.mxu0
        %596 = vst [vmem:[#allocation2] sm:$0xff] %v582
        %597 = vst [vmem:[#allocation2 + $0x8] sm:$0xff] %v585
        %598 = vst [vmem:[#allocation2 + $0x10] sm:$0xff] %v590
        %599 = vst [vmem:[#allocation2 + $0x18] sm:$0xff] %v593
        %v600 = vld [vmem:[#allocation10] sm:$0xff]
        %v601 = vld [vmem:[#allocation10 + $0x8] sm:$0xff]
        %v602 = vld [vmem:[#allocation10 + $0x10] sm:$0xff]
        %v603 = vld [vmem:[#allocation10 + $0x18] sm:$0xff]
        %v604 = vld [vmem:[#allocation10 + $0x20] sm:$0xff]
        %v605 = vld [vmem:[#allocation10 + $0x28] sm:$0xff]
        %v606 = vld [vmem:[#allocation10 + $0x30] sm:$0xff]
        %v607 = vld [vmem:[#allocation10 + $0x38] sm:$0xff]
        %v608 = vld [vmem:[#allocation10 + $0x40] sm:$0xff]
        %v609 = vld [vmem:[#allocation10 + $0x48] sm:$0xff]
        %v610 = vld [vmem:[#allocation10 + $0x50] sm:$0xff]
        %v611 = vld [vmem:[#allocation10 + $0x58] sm:$0xff]
        %v612 = vld [vmem:[#allocation10 + $0x60] sm:$0xff]
        %v613 = vld [vmem:[#allocation10 + $0x68] sm:$0xff]
        %v614 = vld [vmem:[#allocation10 + $0x70] sm:$0xff]
        %v615 = vld [vmem:[#allocation10 + $0x78] sm:$0xff]
        %v616 = vld [vmem:[#allocation3] sm:$0xff]
        %v617 = vld [vmem:[#allocation2] sm:$0xff]
        %618 = vmatprep.subr.mxu0 0.0
        %619 = vmatpush1.msra.mxu0 %v600
        %620 = vmatprep.subr.mxu0 0.0
        %621 = vmatpush1.msra.mxu0 %v601
        %622 = vmatprep.subr.mxu0 0.0
        %623 = vmatpush1.msra.mxu0 %v602
        %624 = vmatprep.subr.mxu0 0.0
        %625 = vmatpush1.msra.mxu0 %v603
        %626 = vmatprep.subr.mxu0 0.0
        %627 = vmatpush1.msra.mxu0 %v604
        %628 = vmatprep.subr.mxu0 0.0
        %629 = vmatpush1.msra.mxu0 %v605
        %630 = vmatprep.subr.mxu0 0.0
        %631 = vmatpush1.msra.mxu0 %v606
        %632 = vmatprep.subr.mxu0 0.0
        %633 = vmatpush1.msra.mxu0 %v607
        %634 = vmatprep.subr.mxu0 0.0
        %635 = vmatpush1.msra.mxu0 %v608
        %636 = vmatprep.subr.mxu0 0.0
        %637 = vmatpush1.msra.mxu0 %v609
        %638 = vmatprep.subr.mxu0 0.0
        %639 = vmatpush1.msra.mxu0 %v610
        %640 = vmatprep.subr.mxu0 0.0
        %641 = vmatpush1.msra.mxu0 %v611
        %642 = vmatprep.subr.mxu0 0.0
        %643 = vmatpush1.msra.mxu0 %v612
        %644 = vmatprep.subr.mxu0 0.0
        %645 = vmatpush1.msra.mxu0 %v613
        %646 = vmatprep.subr.mxu0 0.0
        %647 = vmatpush1.msra.mxu0 %v614
        %648 = vmatprep.subr.mxu0 0.0
        %649 = vmatpush1.msra.mxu0 %v615
        %650 = vmatprep.subr.mxu0 0.0
        %651 = vmatpush1.msra.mxu0 0.0
        %652 = vmatprep.subr.mxu0 0.0
        %653 = vmatpush1.msra.mxu0 0.0
        %654 = vmatprep.subr.mxu0 0.0
        %655 = vmatpush1.msra.mxu0 0.0
        %656 = vmatprep.subr.mxu0 0.0
        %657 = vmatpush1.msra.mxu0 0.0
        %658 = vmatprep.subr.mxu0 0.0
        %659 = vmatpush1.msra.mxu0 0.0
        %660 = vmatprep.subr.mxu0 0.0
        %661 = vmatpush1.msra.mxu0 0.0
        %662 = vmatprep.subr.mxu0 0.0
        %663 = vmatpush1.msra.mxu0 0.0
        %664 = vmatprep.subr.mxu0 0.0
        %665 = vmatpush1.msra.mxu0 0.0
        %666 = vmatprep.subr.mxu0 0.0
        %667 = vmatpush1.msra.mxu0 0.0
        %668 = vmatprep.subr.mxu0 0.0
        %669 = vmatpush1.msra.mxu0 0.0
        %670 = vmatprep.subr.mxu0 0.0
        %671 = vmatpush1.msra.mxu0 0.0
        %672 = vmatprep.subr.mxu0 0.0
        %673 = vmatpush1.msra.mxu0 0.0
        %674 = vmatprep.subr.mxu0 0.0
        %675 = vmatpush1.msra.mxu0 0.0
        %676 = vmatprep.subr.mxu0 0.0
        %677 = vmatpush1.msra.mxu0 0.0
        %678 = vmatprep.subr.mxu0 0.0
        %679 = vmatpush1.msra.mxu0 0.0
        %680 = vmatprep.subr.mxu0 0.0
        %681 = vmatpush1.msra.mxu0 0.0
        %682 = vmatprep.mubr.f32.mxu0 0.0
        %683 = vmatmul.mubr.f32.gmra.mrb[0].mxu0 %v616
        %v684 = vpop.f32.mrb[0].mxu0
        %v685 = vadd.f32 0.0, %v684
        %v686 = vpop.f32.mrb[0].mxu0
        %687 = vdwg.mxu0
        %v688 = vadd.f32 %v617, %v685
        %v689 = vtanh.pop %v688
        %690 = vst [vmem:[#allocation2] sm:$0xff] %v689
        %s691 = scalar_lea.vmem [#allocation2], 8
        %v692 = vld [vmem:[%s691] sm:$0xff]
        %693 = vmatprep.subr.mxu0 0.0
        %694 = vmatpush1.msra.mxu0 %v600
        %695 = vmatprep.subr.mxu0 0.0
        %696 = vmatpush1.msra.mxu0 %v601
        %697 = vmatprep.subr.mxu0 0.0
        %698 = vmatpush1.msra.mxu0 %v602
        %699 = vmatprep.subr.mxu0 0.0
        %700 = vmatpush1.msra.mxu0 %v603
        %701 = vmatprep.subr.mxu0 0.0
        %702 = vmatpush1.msra.mxu0 %v604
        %703 = vmatprep.subr.mxu0 0.0
        %704 = vmatpush1.msra.mxu0 %v605
        %705 = vmatprep.subr.mxu0 0.0
        %706 = vmatpush1.msra.mxu0 %v606
        %707 = vmatprep.subr.mxu0 0.0
        %708 = vmatpush1.msra.mxu0 %v607
        %709 = vmatprep.subr.mxu0 0.0
        %710 = vmatpush1.msra.mxu0 %v608
        %711 = vmatprep.subr.mxu0 0.0
        %712 = vmatpush1.msra.mxu0 %v609
        %713 = vmatprep.subr.mxu0 0.0
        %714 = vmatpush1.msra.mxu0 %v610
        %715 = vmatprep.subr.mxu0 0.0
        %716 = vmatpush1.msra.mxu0 %v611
        %717 = vmatprep.subr.mxu0 0.0
        %718 = vmatpush1.msra.mxu0 %v612
        %719 = vmatprep.subr.mxu0 0.0
        %720 = vmatpush1.msra.mxu0 %v613
        %721 = vmatprep.subr.mxu0 0.0
        %722 = vmatpush1.msra.mxu0 %v614
        %723 = vmatprep.subr.mxu0 0.0
        %724 = vmatpush1.msra.mxu0 %v615
        %725 = vmatprep.subr.mxu0 0.0
        %726 = vmatpush1.msra.mxu0 0.0
        %727 = vmatprep.subr.mxu0 0.0
        %728 = vmatpush1.msra.mxu0 0.0
        %729 = vmatprep.subr.mxu0 0.0
        %730 = vmatpush1.msra.mxu0 0.0
        %731 = vmatprep.subr.mxu0 0.0
        %732 = vmatpush1.msra.mxu0 0.0
        %733 = vmatprep.subr.mxu0 0.0
        %734 = vmatpush1.msra.mxu0 0.0
        %735 = vmatprep.subr.mxu0 0.0
        %736 = vmatpush1.msra.mxu0 0.0
        %737 = vmatprep.subr.mxu0 0.0
        %738 = vmatpush1.msra.mxu0 0.0
        %739 = vmatprep.subr.mxu0 0.0
        %740 = vmatpush1.msra.mxu0 0.0
        %741 = vmatprep.subr.mxu0 0.0
        %742 = vmatpush1.msra.mxu0 0.0
        %743 = vmatprep.subr.mxu0 0.0
        %744 = vmatpush1.msra.mxu0 0.0
        %745 = vmatprep.subr.mxu0 0.0
        %746 = vmatpush1.msra.mxu0 0.0
        %747 = vmatprep.subr.mxu0 0.0
        %748 = vmatpush1.msra.mxu0 0.0
        %749 = vmatprep.subr.mxu0 0.0
        %750 = vmatpush1.msra.mxu0 0.0
        %751 = vmatprep.subr.mxu0 0.0
        %752 = vmatpush1.msra.mxu0 0.0
        %753 = vmatprep.subr.mxu0 0.0
        %754 = vmatpush1.msra.mxu0 0.0
        %755 = vmatprep.subr.mxu0 0.0
        %756 = vmatpush1.msra.mxu0 0.0
        %757 = vmatprep.mubr.f32.mxu0 0.0
        %758 = vmatmul.mubr.f32.gmra.mrb[0].mxu0 %v689
        %v759 = vpop.f32.mrb[0].mxu0
        %v760 = vadd.f32 0.0, %v759
        %v761 = vpop.f32.mrb[0].mxu0
        %762 = vdwg.mxu0
        %v763 = vadd.f32 %v692, %v760
        %v764 = vtanh.pop %v763
        %765 = vst [vmem:[%s691] sm:$0xff] %v764
        %s766 = scalar_lea.vmem [#allocation2], 16
        %v767 = vld [vmem:[%s766] sm:$0xff]
        %768 = vmatprep.subr.mxu0 0.0
        %769 = vmatpush1.msra.mxu0 %v600
        %770 = vmatprep.subr.mxu0 0.0
        %771 = vmatpush1.msra.mxu0 %v601
        %772 = vmatprep.subr.mxu0 0.0
        %773 = vmatpush1.msra.mxu0 %v602
        %774 = vmatprep.subr.mxu0 0.0
        %775 = vmatpush1.msra.mxu0 %v603
        %776 = vmatprep.subr.mxu0 0.0
        %777 = vmatpush1.msra.mxu0 %v604
        %778 = vmatprep.subr.mxu0 0.0
        %779 = vmatpush1.msra.mxu0 %v605
        %780 = vmatprep.subr.mxu0 0.0
        %781 = vmatpush1.msra.mxu0 %v606
        %782 = vmatprep.subr.mxu0 0.0
        %783 = vmatpush1.msra.mxu0 %v607
        %784 = vmatprep.subr.mxu0 0.0
        %785 = vmatpush1.msra.mxu0 %v608
        %786 = vmatprep.subr.mxu0 0.0
        %787 = vmatpush1.msra.mxu0 %v609
        %788 = vmatprep.subr.mxu0 0.0
        %789 = vmatpush1.msra.mxu0 %v610
        %790 = vmatprep.subr.mxu0 0.0
        %791 = vmatpush1.msra.mxu0 %v611
        %792 = vmatprep.subr.mxu0 0.0
        %793 = vmatpush1.msra.mxu0 %v612
        %794 = vmatprep.subr.mxu0 0.0
        %795 = vmatpush1.msra.mxu0 %v613
        %796 = vmatprep.subr.mxu0 0.0
        %797 = vmatpush1.msra.mxu0 %v614
        %798 = vmatprep.subr.mxu0 0.0
        %799 = vmatpush1.msra.mxu0 %v615
        %800 = vmatprep.subr.mxu0 0.0
        %801 = vmatpush1.msra.mxu0 0.0
        %802 = vmatprep.subr.mxu0 0.0
        %803 = vmatpush1.msra.mxu0 0.0
        %804 = vmatprep.subr.mxu0 0.0
        %805 = vmatpush1.msra.mxu0 0.0
        %806 = vmatprep.subr.mxu0 0.0
        %807 = vmatpush1.msra.mxu0 0.0
        %808 = vmatprep.subr.mxu0 0.0
        %809 = vmatpush1.msra.mxu0 0.0
        %810 = vmatprep.subr.mxu0 0.0
        %811 = vmatpush1.msra.mxu0 0.0
        %812 = vmatprep.subr.mxu0 0.0
        %813 = vmatpush1.msra.mxu0 0.0
        %814 = vmatprep.subr.mxu0 0.0
        %815 = vmatpush1.msra.mxu0 0.0
        %816 = vmatprep.subr.mxu0 0.0
        %817 = vmatpush1.msra.mxu0 0.0
        %818 = vmatprep.subr.mxu0 0.0
        %819 = vmatpush1.msra.mxu0 0.0
        %820 = vmatprep.subr.mxu0 0.0
        %821 = vmatpush1.msra.mxu0 0.0
        %822 = vmatprep.subr.mxu0 0.0
        %823 = vmatpush1.msra.mxu0 0.0
        %824 = vmatprep.subr.mxu0 0.0
        %825 = vmatpush1.msra.mxu0 0.0
        %826 = vmatprep.subr.mxu0 0.0
        %827 = vmatpush1.msra.mxu0 0.0
        %828 = vmatprep.subr.mxu0 0.0
        %829 = vmatpush1.msra.mxu0 0.0
        %830 = vmatprep.subr.mxu0 0.0
        %831 = vmatpush1.msra.mxu0 0.0
        %832 = vmatprep.mubr.f32.mxu0 0.0
        %833 = vmatmul.mubr.f32.gmra.mrb[0].mxu0 %v764
        %v834 = vpop.f32.mrb[0].mxu0
        %v835 = vadd.f32 0.0, %v834
        %v836 = vpop.f32.mrb[0].mxu0
        %837 = vdwg.mxu0
        %v838 = vadd.f32 %v767, %v835
        %v839 = vtanh.pop %v838
        %840 = vst [vmem:[%s766] sm:$0xff] %v839
        %s841 = scalar_lea.vmem [#allocation2], 24
        %v842 = vld [vmem:[%s841] sm:$0xff]
        %843 = vmatprep.subr.mxu0 0.0
        %844 = vmatpush1.msra.mxu0 %v600
        %845 = vmatprep.subr.mxu0 0.0
        %846 = vmatpush1.msra.mxu0 %v601
        %847 = vmatprep.subr.mxu0 0.0
        %848 = vmatpush1.msra.mxu0 %v602
        %849 = vmatprep.subr.mxu0 0.0
        %850 = vmatpush1.msra.mxu0 %v603
        %851 = vmatprep.subr.mxu0 0.0
        %852 = vmatpush1.msra.mxu0 %v604
        %853 = vmatprep.subr.mxu0 0.0
        %854 = vmatpush1.msra.mxu0 %v605
        %855 = vmatprep.subr.mxu0 0.0
        %856 = vmatpush1.msra.mxu0 %v606
        %857 = vmatprep.subr.mxu0 0.0
        %858 = vmatpush1.msra.mxu0 %v607
        %859 = vmatprep.subr.mxu0 0.0
        %860 = vmatpush1.msra.mxu0 %v608
        %861 = vmatprep.subr.mxu0 0.0
        %862 = vmatpush1.msra.mxu0 %v609
        %863 = vmatprep.subr.mxu0 0.0
        %864 = vmatpush1.msra.mxu0 %v610
        %865 = vmatprep.subr.mxu0 0.0
        %866 = vmatpush1.msra.mxu0 %v611
        %867 = vmatprep.subr.mxu0 0.0
        %868 = vmatpush1.msra.mxu0 %v612
        %869 = vmatprep.subr.mxu0 0.0
        %870 = vmatpush1.msra.mxu0 %v613
        %871 = vmatprep.subr.mxu0 0.0
        %872 = vmatpush1.msra.mxu0 %v614
        %873 = vmatprep.subr.mxu0 0.0
        %874 = vmatpush1.msra.mxu0 %v615
        %875 = vmatprep.subr.mxu0 0.0
        %876 = vmatpush1.msra.mxu0 0.0
        %877 = vmatprep.subr.mxu0 0.0
        %878 = vmatpush1.msra.mxu0 0.0
        %879 = vmatprep.subr.mxu0 0.0
        %880 = vmatpush1.msra.mxu0 0.0
        %881 = vmatprep.subr.mxu0 0.0
        %882 = vmatpush1.msra.mxu0 0.0
        %883 = vmatprep.subr.mxu0 0.0
        %884 = vmatpush1.msra.mxu0 0.0
        %885 = vmatprep.subr.mxu0 0.0
        %886 = vmatpush1.msra.mxu0 0.0
        %887 = vmatprep.subr.mxu0 0.0
        %888 = vmatpush1.msra.mxu0 0.0
        %889 = vmatprep.subr.mxu0 0.0
        %890 = vmatpush1.msra.mxu0 0.0
        %891 = vmatprep.subr.mxu0 0.0
        %892 = vmatpush1.msra.mxu0 0.0
        %893 = vmatprep.subr.mxu0 0.0
        %894 = vmatpush1.msra.mxu0 0.0
        %895 = vmatprep.subr.mxu0 0.0
        %896 = vmatpush1.msra.mxu0 0.0
        %897 = vmatprep.subr.mxu0 0.0
        %898 = vmatpush1.msra.mxu0 0.0
        %899 = vmatprep.subr.mxu0 0.0
        %900 = vmatpush1.msra.mxu0 0.0
        %901 = vmatprep.subr.mxu0 0.0
        %902 = vmatpush1.msra.mxu0 0.0
        %903 = vmatprep.subr.mxu0 0.0
        %904 = vmatpush1.msra.mxu0 0.0
        %905 = vmatprep.subr.mxu0 0.0
        %906 = vmatpush1.msra.mxu0 0.0
        %907 = vmatprep.mubr.f32.mxu0 0.0
        %908 = vmatmul.mubr.f32.gmra.mrb[0].mxu0 %v839
        %v909 = vpop.f32.mrb[0].mxu0
        %v910 = vadd.f32 0.0, %v909
        %v911 = vpop.f32.mrb[0].mxu0
        %912 = vdwg.mxu0
        %v913 = vadd.f32 %v842, %v910
        %v914 = vtanh.pop %v913
        %915 = vst [vmem:[%s841] sm:$0xff] %v914
        %916 = vst [vmem:[#allocation3] sm:$0xff] %v914
        %v917 = vld [vmem:[#allocation2] sm:$0xff]
        %v918 = vld [vmem:[#allocation2 + $0x8] sm:$0xff]
        %v919 = vld [vmem:[#allocation2 + $0x10] sm:$0xff]
        %v920 = vld [vmem:[#allocation2 + $0x18] sm:$0xff]
        %v921 = vpack.c.bf16 %v918, %v917
        %v922 = vpack.c.bf16 %v920, %v919
        %v923 = vld [vmem:[#allocation12] sm:$0xf]
        %v924 = vld [vmem:[#allocation12 + $0x4] sm:$0xf]
        %v925 = vld [vmem:[#allocation12 + $0x8] sm:$0xf]
        %v926 = vld [vmem:[#allocation12 + $0xc] sm:$0xf]
        %v927 = vld [vmem:[#allocation12 + $0x10] sm:$0xf]
        %v928 = vld [vmem:[#allocation12 + $0x14] sm:$0xf]
        %v929 = vld [vmem:[#allocation12 + $0x18] sm:$0xf]
        %v930 = vld [vmem:[#allocation12 + $0x1c] sm:$0xf]
        %v931 = vld [vmem:[#allocation12 + $0x20] sm:$0xf]
        %v932 = vld [vmem:[#allocation12 + $0x24] sm:$0xf]
        %v933 = vld [vmem:[#allocation12 + $0x28] sm:$0xf]
        %v934 = vld [vmem:[#allocation12 + $0x2c] sm:$0xf]
        %v935 = vld [vmem:[#allocation12 + $0x30] sm:$0xf]
        %v936 = vld [vmem:[#allocation12 + $0x34] sm:$0xf]
        %v937 = vld [vmem:[#allocation12 + $0x38] sm:$0xf]
        %v938 = vld [vmem:[#allocation12 + $0x3c] sm:$0xf]
        %v939 = vld [vmem:[%s6] sm:$0x1]
        %v941 = vlaneseq
        %v942 = vshrl.u32 %v941, 7
        %v943 = vsub.s32 0, %v942
        %v944 = vrot.slane %v939, %v943
        %v962 = vunpack.c.l.b16 %v923
        %v963 = vunpack.c.l.b16 %v924
        %v964 = vunpack.c.l.b16 %v925
        %v965 = vunpack.c.l.b16 %v926
        %v966 = vunpack.c.l.b16 %v927
        %v967 = vunpack.c.l.b16 %v928
        %v968 = vunpack.c.l.b16 %v929
        %v969 = vunpack.c.l.b16 %v930
        %v970 = vunpack.c.l.b16 %v931
        %v971 = vunpack.c.l.b16 %v932
        %v972 = vunpack.c.l.b16 %v933
        %v973 = vunpack.c.l.b16 %v934
        %v974 = vunpack.c.l.b16 %v935
        %v975 = vunpack.c.l.b16 %v936
        %v976 = vunpack.c.l.b16 %v937
        %v977 = vunpack.c.l.b16 %v938
        %v978 = vpack.c.b16 %v963, %v962
        %v979 = vpack.c.b16 %v965, %v964
        %v980 = vpack.c.b16 %v967, %v966
        %v981 = vpack.c.b16 %v969, %v968
        %v982 = vpack.c.b16 %v971, %v970
        %v983 = vpack.c.b16 %v973, %v972
        %v984 = vpack.c.b16 %v975, %v974
        %v985 = vpack.c.b16 %v977, %v976
        %994 = vmatprep.subr.bf16.mxu0 0
        %995 = vmatpush1.bf16.msra.mxu0 %v978
        %996 = vmatprep.subr.bf16.mxu0 0
        %997 = vmatpush1.bf16.msra.mxu0 %v979
        %998 = vmatprep.subr.bf16.mxu0 0
        %999 = vmatpush1.bf16.msra.mxu0 %v980
        %1000 = vmatprep.subr.bf16.mxu0 0
        %1001 = vmatpush1.bf16.msra.mxu0 %v981
        %1002 = vmatprep.subr.bf16.mxu0 0
        %1003 = vmatpush1.bf16.msra.mxu0 %v982
        %1004 = vmatprep.subr.bf16.mxu0 0
        %1005 = vmatpush1.bf16.msra.mxu0 %v983
        %1006 = vmatprep.subr.bf16.mxu0 0
        %1007 = vmatpush1.bf16.msra.mxu0 %v984
        %1008 = vmatprep.subr.bf16.mxu0 0
        %1009 = vmatpush1.bf16.msra.mxu0 %v985
        %1010 = vmatprep.subr.bf16.mxu0 0
        %1011 = vmatpush1.bf16.msra.mxu0 0
        %1012 = vmatprep.subr.bf16.mxu0 0
        %1013 = vmatpush1.bf16.msra.mxu0 0
        %1014 = vmatprep.subr.bf16.mxu0 0
        %1015 = vmatpush1.bf16.msra.mxu0 0
        %1016 = vmatprep.subr.bf16.mxu0 0
        %1017 = vmatpush1.bf16.msra.mxu0 0
        %1018 = vmatprep.subr.bf16.mxu0 0
        %1019 = vmatpush1.bf16.msra.mxu0 0
        %1020 = vmatprep.subr.bf16.mxu0 0
        %1021 = vmatpush1.bf16.msra.mxu0 0
        %1022 = vmatprep.subr.bf16.mxu0 0
        %1023 = vmatpush1.bf16.msra.mxu0 0
        %1024 = vmatprep.subr.bf16.mxu0 0
        %1025 = vmatpush1.bf16.msra.mxu0 0
        %1026 = vmatprep.mubr.bf16.mxu0 0
        %1027 = vmatmul.mubr.bf16.gmra.mrb[0].mxu0 %v921
        %v1028 = vpop.f32.mrb[0].mxu0
        %v1029 = vadd.f32 %v944, %v1028
        %v1030 = vpop.f32.mrb[0].mxu0
        %v1031 = vpop.f32.mrb[0].mxu0
        %v1032 = vadd.f32 %v944, %v1031
        %v1033 = vpop.f32.mrb[0].mxu0
        %1034 = vmatprep.mubr.bf16.mxu0 0
        %1035 = vmatmul.mubr.bf16.gmra.mrb[0].mxu0 %v922
        %v1036 = vpop.f32.mrb[0].mxu0
        %v1037 = vadd.f32 %v944, %v1036
        %v1038 = vpop.f32.mrb[0].mxu0
        %v1039 = vpop.f32.mrb[0].mxu0
        %v1040 = vadd.f32 %v944, %v1039
        %v1041 = vpop.f32.mrb[0].mxu0
        %1042 = vdwg.mxu0
        %1043 = vst [vmem:[%s378] sm:$0xff] %v1029
        %1044 = vst [vmem:[%s378 + $0x8] sm:$0xff] %v1032
        %1045 = vst [vmem:[%s378 + $0x10] sm:$0xff] %v1037
        %1046 = vst [vmem:[%s378 + $0x18] sm:$0xff] %v1040
        %s1047 = sand.u32 %s207, 1
        %s1048 = scalar_lea.sflag [#allocation6], %s1047
        %s1049 = sand.u32 %s207, 1
        %s1050 = smul.addr %s1049, 32
        %s1051 = scalar_lea.vmem [#allocation13], %s1050
        // Predicated region
        $region73: #{tpu_custom_call.1} parent=47 // pred_check
          %p1052 = pneg %p217
        $region74: #{tpu_custom_call.1} parent=47 // pred_check_branch
          %1054 = sbr.rel (%p1052) target = $region76
        $region75: #{tpu_custom_call.1} parent=47 // pred_region
          %s1055 = smul.u32 4, %s31
          %s1057 = ssub.s32 512, 512
          %1058 = vsyncadd %s1048, %s1057
          %s1059 = smul.addr %s30, 8
          %s1060 = sadd.s32 %s1055, %s1059
          %s1061 = smul.addr %s1060, 128
          %s1062 = scalar_lea.hbm %s7, %s1061
          %s1063 = sshll.u32 %s1051, 4
          %s1064 = int_to_ptr.vmem [resolvable:$true] %s1063
          %1069 = dma.vmem_to_hbm [thread:$0]  %s1064, 512, %s1062, %s1048, 128, 128, 8
        $region76: #{tpu_custom_call.1} parent=47 // pred_fallthru
          _
      $region48: #{tpu_custom_call.1} parent=5 // pred_fallthru
        _
      %p1070 = scmp.le.s32.totalorder 2, %s21
      // Predicated region
      $region77: #{tpu_custom_call.1} parent=5 // pred_check
        %p1071 = pneg %p1070
      $region78: #{tpu_custom_call.1} parent=5 // pred_check_branch
        %1073 = sbr.rel (%p1071) target = $region80
      $region79: #{tpu_custom_call.1} parent=5 // pred_region
        %s1074 = ssub.s32 %s21, 2
        // Predicated region
        $region81: #{tpu_custom_call.1} parent=79 // pred_check
          %p1075 = pneg %p223
        $region82: #{tpu_custom_call.1} parent=79 // pred_check_branch
          %1077 = sbr.rel (%p1075) target = $region84
        $region83: #{tpu_custom_call.1} parent=79 // pred_region
          %s1078 = sand.u32 %s208, 1
          %s1079 = scalar_lea.sflag [#allocation6], %s1078
          %s1080 = sand.u32 %s208, 1
          %s1081 = smul.addr %s1080, 32
          %s1082 = scalar_lea.vmem [#allocation13], %s1081
          %1083 = dma.done %s1079, 512
        $region84: #{tpu_custom_call.1} parent=79 // pred_fallthru
          _
      $region80: #{tpu_custom_call.1} parent=5 // pred_fallthru
        _
    $region6: #{tpu_custom_call.1} parent=1 // loop_footer
      %s25 = sadd.s32 1, %s21
    $region7: #{tpu_custom_call.1} parent=1 // loop_footer_branch
      %20 = sbr.rel target = $region3
    $region8: #{tpu_custom_call.1} parent=1 // loop_exit
      _
    %1084 = vsyncpa [#allocation5], 1
    %s1085 = scalar_lea.sflag [#allocation5], 1
    %1086 = vsyncpa %s1085, 1
    %1087 = vsyncpa [#allocation8], 1
    %1088 = vsyncpa [#allocation11], 1
    %1089 = vsyncpa [#allocation6], 1
    %s1090 = scalar_lea.sflag [#allocation6], 1
    %1091 = vsyncpa %s1090, 1

// kernel: tpu_custom_call.1
$region0: #{tpu_custom_call.1}
  #allocation0 [shape = 'u32[]', space=smem, size = 0x4, offset = 0x4, fixed_abs, tag = 'smem constant byte address 0x4 - core index']
  #allocation1 [shape = 'u32[144,128]{1,0:T(1,128)}', space=vmem, size = 0x12000, scoped, tag = 'internal scratch']
  #allocation2 [shape = 'f32[32,128]{1,0:T(8,128)}', space=vmem, size = 0x4000, scoped, tag = 'scratch operand']
  #allocation3 [shape = 'f32[8,128]{1,0:T(8,128)}', space=vmem, size = 0x1000, scoped, tag = 'scratch operand']
  %s0 = inlined_call_operand.hbm [shape: bf16[1,64,256], index: 0, kind: input, shape index: {}]
  %s1 = inlined_call_operand.hbm [shape: f32[8,128], index: 1, kind: input, shape index: {}]
  %s2 = inlined_call_operand.hbm [shape: bf16[256,128], index: 2, kind: input, shape index: {}]
  %s3 = inlined_call_operand.hbm [shape: f32[128,128], index: 3, kind: input, shape index: {}]
  %s4 = inlined_call_operand.vmem [shape: f32[1,128], index: 4, kind: input, shape index: {}]
  %s5 = inlined_call_operand.hbm [shape: bf16[128,128], index: 5, kind: input, shape index: {}]
  %s6 = inlined_call_operand.vmem [shape: f32[1,128], index: 6, kind: input, shape index: {}]
  %s7 = inlined_call_operand.hbm [shape: f32[1,64,128], index: 7, kind: output, shape index: {}]
  %s8 = sld [smem:[#allocation0]]
  $region85: #{tpu_custom_call.1} parent=0
    _
  %s10 = ssub.s32 1, %s8
  %s11 = scalar_select 0, %s10, %s8
  $region1: #{tpu_custom_call.1} parent=0
    #allocation4 [shape = 'u8[32768]{0}', space=vmem, size = 0x8000, scoped, tag = 'input window, operand 0']
    #allocation5 [shape = 's32[2]{0}', space=sflag, size = 0x8, scoped, tag = 'scoped memory for tpu_custom_call.1']
    #allocation6 [shape = 's32[2]{0}', space=sflag, size = 0x8, scoped, tag = 'scoped memory for tpu_custom_call.1']
    #allocation7 [shape = 'u8[4096]{0}', space=vmem, size = 0x1000, scoped, tag = 'input window, operand 1, single buffered']
    #allocation8 [shape = 's32[1]{0}', space=sflag, size = 0x4, scoped, tag = 'scoped memory for tpu_custom_call.1']
    #allocation9 [shape = 'u8[65536]{0}', space=vmem, size = 0x10000, scoped, tag = 'input window, operand 2, single buffered']
    #allocation10 [shape = 'u8[65536]{0}', space=vmem, size = 0x10000, scoped, tag = 'input window, operand 3, single buffered']
    #allocation11 [shape = 's32[1]{0}', space=sflag, size = 0x4, scoped, tag = 'scoped memory for tpu_custom_call.1']
    #allocation12 [shape = 'u8[32768]{0}', space=vmem, size = 0x8000, scoped, tag = 'input window, operand 5, single buffered']
    #allocation13 [shape = 'u8[32768]{0}', space=vmem, size = 0x8000, scoped, tag = 'output window, operand 0']
    %12 = vsyncpa [#allocation5], 0
    %s13 = scalar_lea.sflag [#allocation5], 1
    %14 = vsyncpa %s13, 0
    %15 = vsyncpa [#allocation8], 0
    %16 = vsyncpa [#allocation11], 0
    %17 = vsyncpa [#allocation6], 0
    %s18 = scalar_lea.sflag [#allocation6], 1
    %19 = vsyncpa %s18, 0
    loop: start=0, step=1, limit=4
    $region2: #{tpu_custom_call.1} parent=1 // loop_pre_header
      _
    $region3: #{tpu_custom_call.1} parent=1 // loop_header
      %s21 = sphi 0, %s25
      %p22 = scmp.ge.s32.totalorder %s21, 4
      %s28 = sphi 0, %s40
      %s29 = sphi 0, %s36
      %s30 = sphi 0, %s28
      %s31 = sphi 0, %s29
      %s32 = sphi 0, %s30
      %s33 = sphi 0, %s31
      %s45 = sphi 0, %s47
      %s48 = sphi 0, %s45
      %s49 = sphi 0, %s48
      %s65 = sphi 0, %s49
      %s71 = sphi 0, %s73
      %s74 = sphi 0, %s71
      %s75 = sphi 0, %s74
      %s91 = sphi 0, %s75
      %s95 = sphi 0, %s95
      %s97 = sphi 0, %s95
      %s98 = sphi 0, %s97
      %s112 = sphi 0, %s98
      %s116 = sphi 0, %s116
      %s118 = sphi 0, %s116
      %s119 = sphi 0, %s118
      %s133 = sphi 0, %s119
      %s137 = sphi 0, %s137
      %s139 = sphi 0, %s137
      %s140 = sphi 0, %s139
      %s154 = sphi 0, %s140
      %s158 = sphi 0, %s158
      %s160 = sphi 0, %s158
      %s161 = sphi 0, %s160
      %s175 = sphi 0, %s161
      %s179 = sphi 0, %s179
      %s181 = sphi 0, %s179
      %s182 = sphi 0, %s181
      %s196 = sphi 0, %s182
      %s204 = sphi 0, %s206
      %s207 = sphi 0, %s204
      %s208 = sphi 0, %s207
      %s224 = sphi 0, %s208
    $region4: #{tpu_custom_call.1} parent=1 // loop_header_branch
      %24 = sbr.rel (%p22) target = $region8
    $region5: #{tpu_custom_call.1} parent=1 // loop_body
      %s26 = ssub.s32 %s21, 1
      %s27 = ssub.s32 %s21, 2
      %s34 = sadd.s32 1, %s29
      %p35 = scmp.ge.s32.totalorder %s34, 2
      %s36 = scalar_select %p35, 0, %s34
      %s37 = sadd.s32 1, %s28
      %s38 = scalar_select %p35, %s37, %s28
      %p39 = scmp.ge.s32.totalorder %s38, 1
      %s40 = scalar_select %p39, 0, %s38
      %s41 = ssub.s32 %s28, %s40
      %s42 = ssub.s32 %s29, %s36
      %s43 = sor.u32 %s41, %s42
      %p44 = scmp.eq.s32.totalorder %s43, 0
      %s46 = sadd.s32 %s45, 1
      %s47 = scalar_select %p44, %s45, %s46
      %p50 = pneg %p44
      %p51 = scmp.eq.s32.totalorder %s21, 1
      %p52 = por %p50, %p51
      %p53 = scmp.ne.s32.totalorder %s45, %s48
      %p54 = scmp.eq.s32.totalorder %s21, 0
      %p55 = por %p53, %p54
      %p56 = scmp.ne.s32.totalorder %s45, %s48
      %p57 = scmp.eq.s32.totalorder %s26, 1
      %p58 = por %p56, %p57
      %p59 = scmp.ne.s32.totalorder %s48, %s49
      %p60 = scmp.eq.s32.totalorder %s26, 0
      %p61 = por %p59, %p60
      %p62 = scmp.ne.s32.totalorder %s48, %s49
      %p63 = scmp.eq.s32.totalorder %s27, 1
      %p64 = por %p62, %p63
      %p66 = scmp.ne.s32.totalorder %s49, %s65
      %p67 = scmp.eq.s32.totalorder %s27, 0
      %p68 = por %p66, %p67
      %s69 = ssub.s32 %s28, %s40
      %p70 = scmp.eq.s32.totalorder %s69, 0
      %s72 = sadd.s32 %s71, 1
      %s73 = scalar_select %p70, %s71, %s72
      %p76 = pneg %p70
      %p77 = scmp.eq.s32.totalorder %s21, 1
      %p78 = por %p76, %p77
      %p79 = scmp.ne.s32.totalorder %s71, %s74
      %p80 = scmp.eq.s32.totalorder %s21, 0
      %p81 = por %p79, %p80
      %p82 = scmp.ne.s32.totalorder %s71, %s74
      %p83 = scmp.eq.s32.totalorder %s26, 1
      %p84 = por %p82, %p83
      %p85 = scmp.ne.s32.totalorder %s74, %s75
      %p86 = scmp.eq.s32.totalorder %s26, 0
      %p87 = por %p85, %p86
      %p88 = scmp.ne.s32.totalorder %s74, %s75
      %p89 = scmp.eq.s32.totalorder %s27, 1
      %p90 = por %p88, %p89
      %p92 = scmp.ne.s32.totalorder %s75, %s91
      %p93 = scmp.eq.s32.totalorder %s27, 0
      %p94 = por %p92, %p93
      %s96 = sadd.s32 %s95, 1
      %p99 = scmp.eq.s32.totalorder %s21, 1
      %p100 = scmp.ne.s32.totalorder %s95, %s97
      %p101 = scmp.eq.s32.totalorder %s21, 0
      %p102 = por %p100, %p101
      %p103 = scmp.ne.s32.totalorder %s95, %s97
      %p104 = scmp.eq.s32.totalorder %s26, 1
      %p105 = por %p103, %p104
      %p106 = scmp.ne.s32.totalorder %s97, %s98
      %p107 = scmp.eq.s32.totalorder %s26, 0
      %p108 = por %p106, %p107
      %p109 = scmp.ne.s32.totalorder %s97, %s98
      %p110 = scmp.eq.s32.totalorder %s27, 1
      %p111 = por %p109, %p110
      %p113 = scmp.ne.s32.totalorder %s98, %s112
      %p114 = scmp.eq.s32.totalorder %s27, 0
      %p115 = por %p113, %p114
      %s117 = sadd.s32 %s116, 1
      %p120 = scmp.eq.s32.totalorder %s21, 1
      %p121 = scmp.ne.s32.totalorder %s116, %s118
      %p122 = scmp.eq.s32.totalorder %s21, 0
      %p123 = por %p121, %p122
      %p124 = scmp.ne.s32.totalorder %s116, %s118
      %p125 = scmp.eq.s32.totalorder %s26, 1
      %p126 = por %p124, %p125
      %p127 = scmp.ne.s32.totalorder %s118, %s119
      %p128 = scmp.eq.s32.totalorder %s26, 0
      %p129 = por %p127, %p128
      %p130 = scmp.ne.s32.totalorder %s118, %s119
      %p131 = scmp.eq.s32.totalorder %s27, 1
      %p132 = por %p130, %p131
      %p134 = scmp.ne.s32.totalorder %s119, %s133
      %p135 = scmp.eq.s32.totalorder %s27, 0
      %p136 = por %p134, %p135
      %s138 = sadd.s32 %s137, 1
      %p141 = scmp.eq.s32.totalorder %s21, 1
      %p142 = scmp.ne.s32.totalorder %s137, %s139
      %p143 = scmp.eq.s32.totalorder %s21, 0
      %p144 = por %p142, %p143
      %p145 = scmp.ne.s32.totalorder %s137, %s139
      %p146 = scmp.eq.s32.totalorder %s26, 1
      %p147 = por %p145, %p146
      %p148 = scmp.ne.s32.totalorder %s139, %s140
      %p149 = scmp.eq.s32.totalorder %s26, 0
      %p150 = por %p148, %p149
      %p151 = scmp.ne.s32.totalorder %s139, %s140
      %p152 = scmp.eq.s32.totalorder %s27, 1
      %p153 = por %p151, %p152
      %p155 = scmp.ne.s32.totalorder %s140, %s154
      %p156 = scmp.eq.s32.totalorder %s27, 0
      %p157 = por %p155, %p156
      %s159 = sadd.s32 %s158, 1
      %p162 = scmp.eq.s32.totalorder %s21, 1
      %p163 = scmp.ne.s32.totalorder %s158, %s160
      %p164 = scmp.eq.s32.totalorder %s21, 0
      %p165 = por %p163, %p164
      %p166 = scmp.ne.s32.totalorder %s158, %s160
      %p167 = scmp.eq.s32.totalorder %s26, 1
      %p168 = por %p166, %p167
      %p169 = scmp.ne.s32.totalorder %s160, %s161
      %p170 = scmp.eq.s32.totalorder %s26, 0
      %p171 = por %p169, %p170
      %p172 = scmp.ne.s32.totalorder %s160, %s161
      %p173 = scmp.eq.s32.totalorder %s27, 1
      %p174 = por %p172, %p173
      %p176 = scmp.ne.s32.totalorder %s161, %s175
      %p177 = scmp.eq.s32.totalorder %s27, 0
      %p178 = por %p176, %p177
      %s180 = sadd.s32 %s179, 1
      %p183 = scmp.eq.s32.totalorder %s21, 1
      %p184 = scmp.ne.s32.totalorder %s179, %s181
      %p185 = scmp.eq.s32.totalorder %s21, 0
      %p186 = por %p184, %p185
      %p187 = scmp.ne.s32.totalorder %s179, %s181
      %p188 = scmp.eq.s32.totalorder %s26, 1
      %p189 = por %p187, %p188
      %p190 = scmp.ne.s32.totalorder %s181, %s182
      %p191 = scmp.eq.s32.totalorder %s26, 0
      %p192 = por %p190, %p191
      %p193 = scmp.ne.s32.totalorder %s181, %s182
      %p194 = scmp.eq.s32.totalorder %s27, 1
      %p195 = por %p193, %p194
      %p197 = scmp.ne.s32.totalorder %s182, %s196
      %p198 = scmp.eq.s32.totalorder %s27, 0
      %p199 = por %p197, %p198
      %s200 = ssub.s32 %s28, %s40
      %s201 = ssub.s32 %s29, %s36
      %s202 = sor.u32 %s200, %s201
      %p203 = scmp.eq.s32.totalorder %s202, 0
      %s205 = sadd.s32 %s204, 1
      %s206 = scalar_select %p203, %s204, %s205
      %p209 = pneg %p203
      %p210 = scmp.eq.s32.totalorder %s21, 1
      %p211 = por %p209, %p210
      %p212 = scmp.ne.s32.totalorder %s204, %s207
      %p213 = scmp.eq.s32.totalorder %s21, 0
      %p214 = por %p212, %p213
      %p215 = scmp.ne.s32.totalorder %s204, %s207
      %p216 = scmp.eq.s32.totalorder %s26, 1
      %p217 = por %p215, %p216
      %p218 = scmp.ne.s32.totalorder %s207, %s208
      %p219 = scmp.eq.s32.totalorder %s26, 0
      %p220 = por %p218, %p219
      %p221 = scmp.ne.s32.totalorder %s207, %s208
      %p222 = scmp.eq.s32.totalorder %s27, 1
      %p223 = por %p221, %p222
      %p225 = scmp.ne.s32.totalorder %s208, %s224
      %p226 = scmp.eq.s32.totalorder %s27, 0
      %p227 = por %p225, %p226
      %p228 = scmp.le.s32.totalorder 1, %s21
      %p229 = scmp.lt.s32.totalorder %s21, 3
      %p230 = pnand %p228, %p229
      %p231 = pneg %p230
      // Predicated region
      $region9: #{tpu_custom_call.1} parent=5 // pred_check
        _
      $region10: #{tpu_custom_call.1} parent=5 // pred_check_branch
        %233 = sbr.rel (%p230) target = $region12
      $region11: #{tpu_custom_call.1} parent=5 // pred_region
        %s234 = ssub.s32 %s21, 1
        // Predicated region
        $region13: #{tpu_custom_call.1} parent=11 // pred_check
          %p235 = pneg %p87
        $region14: #{tpu_custom_call.1} parent=11 // pred_check_branch
          %237 = sbr.rel (%p235) target = $region16
        $region15: #{tpu_custom_call.1} parent=11 // pred_region
          %s239 = ssub.s32 128, 128
          %240 = vsyncadd [#allocation8], %s239
          %s241 = smul.addr %s30, 128
          %s242 = scalar_lea.hbm %s1, %s241
          %s244 = sshll.u32 [#allocation7], 4
          %s245 = int_to_ptr.vmem [resolvable:$true] %s244
          %247 = dma.hbm_to_vmem [thread:$0]  %s242, 128, %s245, [#allocation8]
        $region16: #{tpu_custom_call.1} parent=11 // pred_fallthru
          _
        // Predicated region
        $region17: #{tpu_custom_call.1} parent=11 // pred_check
          %p248 = pneg %p108
        $region18: #{tpu_custom_call.1} parent=11 // pred_check_branch
          %250 = sbr.rel (%p248) target = $region20
        $region19: #{tpu_custom_call.1} parent=11 // pred_region
          %s252 = ssub.s32 2048, 2048
          %253 = vsyncadd [#allocation8], %s252
          %s254 = sshll.u32 [#allocation9], 4
          %s255 = int_to_ptr.vmem [resolvable:$true] %s254
          %260 = dma.hbm_to_vmem [thread:$0]  %s2, 2048, %s255, [#allocation8], 64, 64, 4
        $region20: #{tpu_custom_call.1} parent=11 // pred_fallthru
          _
        // Predicated region
        $region21: #{tpu_custom_call.1} parent=11 // pred_check
          %p261 = pneg %p129
        $region22: #{tpu_custom_call.1} parent=11 // pred_check_branch
          %263 = sbr.rel (%p261) target = $region24
        $region23: #{tpu_custom_call.1} parent=11 // pred_region
          %s265 = ssub.s32 2048, 2048
          %266 = vsyncadd [#allocation11], %s265
          %s267 = sshll.u32 [#allocation10], 4
          %s268 = int_to_ptr.vmem [resolvable:$true] %s267
          %273 = dma.hbm_to_vmem [thread:$0]  %s3, 2048, %s268, [#allocation11], 128, 128, 8
        $region24: #{tpu_custom_call.1} parent=11 // pred_fallthru
          _
        // Predicated region
        $region25: #{tpu_custom_call.1} parent=11 // pred_check
          %p274 = pneg %p150
        $region26: #{tpu_custom_call.1} parent=11 // pred_check_branch
          %276 = sbr.rel (%p274) target = $region28
        $region27: #{tpu_custom_call.1} parent=11 // pred_region
          _
        $region28: #{tpu_custom_call.1} parent=11 // pred_fallthru
          _
        // Predicated region
        $region29: #{tpu_custom_call.1} parent=11 // pred_check
          %p277 = pneg %p171
        $region30: #{tpu_custom_call.1} parent=11 // pred_check_branch
          %279 = sbr.rel (%p277) target = $region32
        $region31: #{tpu_custom_call.1} parent=11 // pred_region
          %s281 = ssub.s32 1024, 1024
          %282 = vsyncadd [#allocation11], %s281
          %s283 = sshll.u32 [#allocation12], 4
          %s284 = int_to_ptr.vmem [resolvable:$true] %s283
          %289 = dma.hbm_to_vmem [thread:$0]  %s5, 1024, %s284, [#allocation11], 64, 64, 4
        $region32: #{tpu_custom_call.1} parent=11 // pred_fallthru
          _
        // Predicated region
        $region33: #{tpu_custom_call.1} parent=11 // pred_check
          %p290 = pneg %p192
        $region34: #{tpu_custom_call.1} parent=11 // pred_check_branch
          %292 = sbr.rel (%p290) target = $region36
        $region35: #{tpu_custom_call.1} parent=11 // pred_region
          _
        $region36: #{tpu_custom_call.1} parent=11 // pred_fallthru
          _
      $region12: #{tpu_custom_call.1} parent=5 // pred_fallthru
        _
      %p293 = scmp.lt.s32.totalorder %s21, 2
      // Predicated region
      $region37: #{tpu_custom_call.1} parent=5 // pred_check
        %p294 = pneg %p293
      $region38: #{tpu_custom_call.1} parent=5 // pred_check_branch
        %296 = sbr.rel (%p294) target = $region40
      $region39: #{tpu_custom_call.1} parent=5 // pred_region
        // Predicated region
        $region41: #{tpu_custom_call.1} parent=39 // pred_check
          %p297 = pneg %p55
        $region42: #{tpu_custom_call.1} parent=39 // pred_check_branch
          %299 = sbr.rel (%p297) target = $region44
        $region43: #{tpu_custom_call.1} parent=39 // pred_region
          %s300 = sand.u32 %s45, 1
          %s301 = scalar_lea.sflag [#allocation5], %s300
          %s302 = sand.u32 %s45, 1
          %s303 = smul.addr %s302, 32
          %s304 = scalar_lea.vmem [#allocation4], %s303
          %s305 = smul.u32 4, %s29
          %s307 = ssub.s32 512, 512
          %308 = vsyncadd %s301, %s307
          %s309 = smul.addr %s305, 2
          %s310 = smul.addr %s28, 16
          %s311 = sadd.s32 %s309, %s310
          %s312 = smul.addr %s311, 64
          %s313 = scalar_lea.hbm %s0, %s312
          %s314 = sshll.u32 %s304, 4
          %s315 = int_to_ptr.vmem [resolvable:$true] %s314
          %320 = dma.hbm_to_vmem [thread:$0]  %s313, 512, %s315, %s301, 128, 128, 8
        $region44: #{tpu_custom_call.1} parent=39 // pred_fallthru
          _
      $region40: #{tpu_custom_call.1} parent=5 // pred_fallthru
        _
      %p321 = scmp.le.s32.totalorder 1, %s21
      %p322 = scmp.lt.s32.totalorder %s21, 3
      %p323 = pnand %p321, %p322
      %p324 = pneg %p323
      // Predicated region
      $region45: #{tpu_custom_call.1} parent=5 // pred_check
        _
      $region46: #{tpu_custom_call.1} parent=5 // pred_check_branch
        %326 = sbr.rel (%p323) target = $region48
      $region47: #{tpu_custom_call.1} parent=5 // pred_region
        %s327 = ssub.s32 %s21, 1
        %s328 = sand.u32 %s48, 1
        %s329 = scalar_lea.sflag [#allocation5], %s328
        %s330 = sand.u32 %s48, 1
        %s331 = smul.addr %s330, 32
        %s332 = scalar_lea.vmem [#allocation4], %s331
        // Predicated region
        $region49: #{tpu_custom_call.1} parent=47 // pred_check
          %p333 = pneg %p61
        $region50: #{tpu_custom_call.1} parent=47 // pred_check_branch
          %335 = sbr.rel (%p333) target = $region52
        $region51: #{tpu_custom_call.1} parent=47 // pred_region
          %336 = dma.done %s329, 512
        $region52: #{tpu_custom_call.1} parent=47 // pred_fallthru
          _
        // Predicated region
        $region53: #{tpu_custom_call.1} parent=47 // pred_check
          %p337 = pneg %p87
        $region54: #{tpu_custom_call.1} parent=47 // pred_check_branch
          %339 = sbr.rel (%p337) target = $region56
        $region55: #{tpu_custom_call.1} parent=47 // pred_region
          %340 = dma.done [#allocation8], 128
        $region56: #{tpu_custom_call.1} parent=47 // pred_fallthru
          _
        // Predicated region
        $region57: #{tpu_custom_call.1} parent=47 // pred_check
          %p341 = pneg %p108
        $region58: #{tpu_custom_call.1} parent=47 // pred_check_branch
          %343 = sbr.rel (%p341) target = $region60
        $region59: #{tpu_custom_call.1} parent=47 // pred_region
          %344 = dma.done [#allocation8], 2048
        $region60: #{tpu_custom_call.1} parent=47 // pred_fallthru
          _
        // Predicated region
        $region61: #{tpu_custom_call.1} parent=47 // pred_check
          %p345 = pneg %p129
        $region62: #{tpu_custom_call.1} parent=47 // pred_check_branch
          %347 = sbr.rel (%p345) target = $region64
        $region63: #{tpu_custom_call.1} parent=47 // pred_region
          %348 = dma.done [#allocation11], 2048
        $region64: #{tpu_custom_call.1} parent=47 // pred_fallthru
          _
        // Predicated region
        $region65: #{tpu_custom_call.1} parent=47 // pred_check
          %p349 = pneg %p171
        $region66: #{tpu_custom_call.1} parent=47 // pred_check_branch
          %351 = sbr.rel (%p349) target = $region68
        $region67: #{tpu_custom_call.1} parent=47 // pred_region
          %352 = dma.done [#allocation11], 1024
        $region68: #{tpu_custom_call.1} parent=47 // pred_fallthru
          _
        %s353 = sand.u32 %s48, 1
        %s354 = scalar_lea.sflag [#allocation5], %s353
        %s355 = sand.u32 %s48, 1
        %s356 = smul.addr %s355, 32
        %s357 = scalar_lea.vmem [#allocation4], %s356
        %p358 = pneg %p61
        %p359 = pneg %p58
        %p360 = pneg %p87
        %p361 = pneg %p84
        %p362 = pneg %p108
        %p363 = pneg %p105
        %p364 = pneg %p129
        %p365 = pneg %p126
        %p366 = pneg %p150
        %p367 = pneg %p147
        %p368 = pneg %p171
        %p369 = pneg %p168
        %p370 = pneg %p192
        %p371 = pneg %p189
        %p372 = pneg %p220
        %p373 = pneg %p217
        %s374 = sand.u32 %s207, 1
        %s375 = scalar_lea.sflag [#allocation6], %s374
        %s376 = sand.u32 %s207, 1
        %s377 = smul.addr %s376, 32
        %s378 = scalar_lea.vmem [#allocation13], %s377
        %s379 = smul.u32 4, %s31
        %s380 = smul.u32 4, %s31
        %p382 = scmp.eq.s32.totalorder %s31, 0
        // Predicated region
        $region69: #{tpu_custom_call.1} parent=47 // pred_check
          %p383 = pneg %p382
        $region70: #{tpu_custom_call.1} parent=47 // pred_check_branch
          %385 = sbr.rel (%p383) target = $region72
        $region71: #{tpu_custom_call.1} parent=47 // pred_region
          %v386 = vld [vmem:[#allocation7] sm:$0xff]
          %387 = vst [vmem:[#allocation3] sm:$0xff] %v386
        $region72: #{tpu_custom_call.1} parent=47 // pred_fallthru
          _
        %v388 = vld [vmem:[%s332] sm:$0xff]
        %v389 = vld [vmem:[%s332 + $0x8] sm:$0xff]
        %v390 = vld [vmem:[%s332 + $0x10] sm:$0xff]
        %v391 = vld [vmem:[%s332 + $0x18] sm:$0xff]
        %v392 = vld [vmem:[#allocation9] sm:$0xf]
        %v393 = vld [vmem:[#allocation9 + $0x4] sm:$0xf]
        %v394 = vld [vmem:[#allocation9 + $0x8] sm:$0xf]
        %v395 = vld [vmem:[#allocation9 + $0xc] sm:$0xf]
        %v396 = vld [vmem:[#allocation9 + $0x10] sm:$0xf]
        %v397 = vld [vmem:[#allocation9 + $0x14] sm:$0xf]
        %v398 = vld [vmem:[#allocation9 + $0x18] sm:$0xf]
        %v399 = vld [vmem:[#allocation9 + $0x1c] sm:$0xf]
        %v400 = vld [vmem:[#allocation9 + $0x20] sm:$0xf]
        %v401 = vld [vmem:[#allocation9 + $0x24] sm:$0xf]
        %v402 = vld [vmem:[#allocation9 + $0x28] sm:$0xf]
        %v403 = vld [vmem:[#allocation9 + $0x2c] sm:$0xf]
        %v404 = vld [vmem:[#allocation9 + $0x30] sm:$0xf]
        %v405 = vld [vmem:[#allocation9 + $0x34] sm:$0xf]
        %v406 = vld [vmem:[#allocation9 + $0x38] sm:$0xf]
        %v407 = vld [vmem:[#allocation9 + $0x3c] sm:$0xf]
        %v408 = vld [vmem:[#allocation9 + $0x40] sm:$0xf]
        %v409 = vld [vmem:[#allocation9 + $0x44] sm:$0xf]
        %v410 = vld [vmem:[#allocation9 + $0x48] sm:$0xf]
        %v411 = vld [vmem:[#allocation9 + $0x4c] sm:$0xf]
        %v412 = vld [vmem:[#allocation9 + $0x50] sm:$0xf]
        %v413 = vld [vmem:[#allocation9 + $0x54] sm:$0xf]
        %v414 = vld [vmem:[#allocation9 + $0x58] sm:$0xf]
        %v415 = vld [vmem:[#allocation9 + $0x5c] sm:$0xf]
        %v416 = vld [vmem:[#allocation9 + $0x60] sm:$0xf]
        %v417 = vld [vmem:[#allocation9 + $0x64] sm:$0xf]
        %v418 = vld [vmem:[#allocation9 + $0x68] sm:$0xf]
        %v419 = vld [vmem:[#allocation9 + $0x6c] sm:$0xf]
        %v420 = vld [vmem:[#allocation9 + $0x70] sm:$0xf]
        %v421 = vld [vmem:[#allocation9 + $0x74] sm:$0xf]
        %v422 = vld [vmem:[#allocation9 + $0x78] sm:$0xf]
        %v423 = vld [vmem:[#allocation9 + $0x7c] sm:$0xf]
        %v424 = vld [vmem:[%s4] sm:$0x1]
        %v426 = vlaneseq
        %v427 = vshrl.u32 %v426, 7
        %v428 = vsub.s32 0, %v427
        %v429 = vrot.slane %v424, %v428
        %v435 = vunpack.c.l.b16 %v388
        %v436 = vunpack.c.h.b16 %v388
        %v437 = vunpack.c.l.b16 %v389
        %v438 = vunpack.c.h.b16 %v389
        %v439 = vunpack.c.l.b16 %v390
        %v440 = vunpack.c.h.b16 %v390
        %v441 = vunpack.c.l.b16 %v391
        %v442 = vunpack.c.h.b16 %v391
        %v443 = vpack.c.b16 %v437, %v435
        %v444 = vpack.c.b16 %v438, %v436
        %v445 = vpack.c.b16 %v441, %v439
        %v446 = vpack.c.b16 %v442, %v440
        %v483 = vunpack.c.l.b16 %v392
        %v484 = vunpack.c.l.b16 %v393
        %v485 = vunpack.c.l.b16 %v394
        %v486 = vunpack.c.l.b16 %v395
        %v487 = vunpack.c.l.b16 %v396
        %v488 = vunpack.c.l.b16 %v397
        %v489 = vunpack.c.l.b16 %v398
        %v490 = vunpack.c.l.b16 %v399
        %v491 = vunpack.c.l.b16 %v400
        %v492 = vunpack.c.l.b16 %v401
        %v493 = vunpack.c.l.b16 %v402
        %v494 = vunpack.c.l.b16 %v403
        %v495 = vunpack.c.l.b16 %v404
        %v496 = vunpack.c.l.b16 %v405
        %v497 = vunpack.c.l.b16 %v406
        %v498 = vunpack.c.l.b16 %v407
        %v499 = vunpack.c.l.b16 %v408
        %v500 = vunpack.c.l.b16 %v409
        %v501 = vunpack.c.l.b16 %v410
        %v502 = vunpack.c.l.b16 %v411
        %v503 = vunpack.c.l.b16 %v412
        %v504 = vunpack.c.l.b16 %v413
        %v505 = vunpack.c.l.b16 %v414
        %v506 = vunpack.c.l.b16 %v415
        %v507 = vunpack.c.l.b16 %v416
        %v508 = vunpack.c.l.b16 %v417
        %v509 = vunpack.c.l.b16 %v418
        %v510 = vunpack.c.l.b16 %v419
        %v511 = vunpack.c.l.b16 %v420
        %v512 = vunpack.c.l.b16 %v421
        %v513 = vunpack.c.l.b16 %v422
        %v514 = vunpack.c.l.b16 %v423
        %v515 = vpack.c.b16 %v484, %v483
        %v516 = vpack.c.b16 %v486, %v485
        %v517 = vpack.c.b16 %v488, %v487
        %v518 = vpack.c.b16 %v490, %v489
        %v519 = vpack.c.b16 %v492, %v491
        %v520 = vpack.c.b16 %v494, %v493
        %v521 = vpack.c.b16 %v496, %v495
        %v522 = vpack.c.b16 %v498, %v497
        %v523 = vpack.c.b16 %v500, %v499
        %v524 = vpack.c.b16 %v502, %v501
        %v525 = vpack.c.b16 %v504, %v503
        %v526 = vpack.c.b16 %v506, %v505
        %v527 = vpack.c.b16 %v508, %v507
        %v528 = vpack.c.b16 %v510, %v509
        %v529 = vpack.c.b16 %v512, %v511
        %v530 = vpack.c.b16 %v514, %v513
        %547 = vmatprep.subr.bf16.mxu0 0
        %548 = vmatpush1.bf16.msra.mxu0 %v515
        %549 = vmatprep.subr.bf16.mxu0 0
        %550 = vmatpush1.bf16.msra.mxu0 %v516
        %551 = vmatprep.subr.bf16.mxu0 0
        %552 = vmatpush1.bf16.msra.mxu0 %v517
        %553 = vmatprep.subr.bf16.mxu0 0
        %554 = vmatpush1.bf16.msra.mxu0 %v518
        %555 = vmatprep.subr.bf16.mxu0 0
        %556 = vmatpush1.bf16.msra.mxu0 %v519
        %557 = vmatprep.subr.bf16.mxu0 0
        %558 = vmatpush1.bf16.msra.mxu0 %v520
        %559 = vmatprep.subr.bf16.mxu0 0
        %560 = vmatpush1.bf16.msra.mxu0 %v521
        %561 = vmatprep.subr.bf16.mxu0 0
        %562 = vmatpush1.bf16.msra.mxu0 %v522
        %563 = vmatprep.subr.bf16.mxu0 0
        %564 = vmatpush1.bf16.msra.mxu0 %v523
        %565 = vmatprep.subr.bf16.mxu0 0
        %566 = vmatpush1.bf16.msra.mxu0 %v524
        %567 = vmatprep.subr.bf16.mxu0 0
        %568 = vmatpush1.bf16.msra.mxu0 %v525
        %569 = vmatprep.subr.bf16.mxu0 0
        %570 = vmatpush1.bf16.msra.mxu0 %v526
        %571 = vmatprep.subr.bf16.mxu0 0
        %572 = vmatpush1.bf16.msra.mxu0 %v527
        %573 = vmatprep.subr.bf16.mxu0 0
        %574 = vmatpush1.bf16.msra.mxu0 %v528
        %575 = vmatprep.subr.bf16.mxu0 0
        %576 = vmatpush1.bf16.msra.mxu0 %v529
        %577 = vmatprep.subr.bf16.mxu0 0
        %578 = vmatpush1.bf16.msra.mxu0 %v530
        %579 = vmatprep.mubr.bf16.mxu0 %v444
        %580 = vmatmul.mubr.bf16.gmra.mrb[0].mxu0 %v443
        %v581 = vpop.f32.mrb[0].mxu0
        %v582 = vadd.f32 %v429, %v581
        %v583 = vpop.f32.mrb[0].mxu0
        %v584 = vpop.f32.mrb[0].mxu0
        %v585 = vadd.f32 %v429, %v584
        %v586 = vpop.f32.mrb[0].mxu0
        %587 = vmatprep.mubr.bf16.mxu0 %v446
        %588 = vmatmul.mubr.bf16.gmra.mrb[0].mxu0 %v445
        %v589 = vpop.f32.mrb[0].mxu0
        %v590 = vadd.f32 %v429, %v589
        %v591 = vpop.f32.mrb[0].mxu0
        %v592 = vpop.f32.mrb[0].mxu0
        %v593 = vadd.f32 %v429, %v592
        %v594 = vpop.f32.mrb[0].mxu0
        %595 = vdwg.mxu0
        %596 = vst [vmem:[#allocation2] sm:$0xff] %v582
        %597 = vst [vmem:[#allocation2 + $0x8] sm:$0xff] %v585
        %598 = vst [vmem:[#allocation2 + $0x10] sm:$0xff] %v590
        %599 = vst [vmem:[#allocation2 + $0x18] sm:$0xff] %v593
        %v600 = vld [vmem:[#allocation10] sm:$0xff]
        %v601 = vld [vmem:[#allocation10 + $0x8] sm:$0xff]
        %v602 = vld [vmem:[#allocation10 + $0x10] sm:$0xff]
        %v603 = vld [vmem:[#allocation10 + $0x18] sm:$0xff]
        %v604 = vld [vmem:[#allocation10 + $0x20] sm:$0xff]
        %v605 = vld [vmem:[#allocation10 + $0x28] sm:$0xff]
        %v606 = vld [vmem:[#allocation10 + $0x30] sm:$0xff]
        %v607 = vld [vmem:[#allocation10 + $0x38] sm:$0xff]
        %v608 = vld [vmem:[#allocation10 + $0x40] sm:$0xff]
        %v609 = vld [vmem:[#allocation10 + $0x48] sm:$0xff]
        %v610 = vld [vmem:[#allocation10 + $0x50] sm:$0xff]
        %v611 = vld [vmem:[#allocation10 + $0x58] sm:$0xff]
        %v612 = vld [vmem:[#allocation10 + $0x60] sm:$0xff]
        %v613 = vld [vmem:[#allocation10 + $0x68] sm:$0xff]
        %v614 = vld [vmem:[#allocation10 + $0x70] sm:$0xff]
        %v615 = vld [vmem:[#allocation10 + $0x78] sm:$0xff]
        %v616 = vld [vmem:[#allocation3] sm:$0xff]
        %v617 = vld [vmem:[#allocation2] sm:$0xff]
        %618 = vmatprep.subr.mxu0 0.0
        %619 = vmatpush1.msra.mxu0 %v600
        %620 = vmatprep.subr.mxu0 0.0
        %621 = vmatpush1.msra.mxu0 %v601
        %622 = vmatprep.subr.mxu0 0.0
        %623 = vmatpush1.msra.mxu0 %v602
        %624 = vmatprep.subr.mxu0 0.0
        %625 = vmatpush1.msra.mxu0 %v603
        %626 = vmatprep.subr.mxu0 0.0
        %627 = vmatpush1.msra.mxu0 %v604
        %628 = vmatprep.subr.mxu0 0.0
        %629 = vmatpush1.msra.mxu0 %v605
        %630 = vmatprep.subr.mxu0 0.0
        %631 = vmatpush1.msra.mxu0 %v606
        %632 = vmatprep.subr.mxu0 0.0
        %633 = vmatpush1.msra.mxu0 %v607
        %634 = vmatprep.subr.mxu0 0.0
        %635 = vmatpush1.msra.mxu0 %v608
        %636 = vmatprep.subr.mxu0 0.0
        %637 = vmatpush1.msra.mxu0 %v609
        %638 = vmatprep.subr.mxu0 0.0
        %639 = vmatpush1.msra.mxu0 %v610
        %640 = vmatprep.subr.mxu0 0.0
        %641 = vmatpush1.msra.mxu0 %v611
        %642 = vmatprep.subr.mxu0 0.0
        %643 = vmatpush1.msra.mxu0 %v612
        %644 = vmatprep.subr.mxu0 0.0
        %645 = vmatpush1.msra.mxu0 %v613
        %646 = vmatprep.subr.mxu0 0.0
        %647 = vmatpush1.msra.mxu0 %v614
        %648 = vmatprep.subr.mxu0 0.0
        %649 = vmatpush1.msra.mxu0 %v615
        %650 = vmatprep.subr.mxu0 0.0
        %651 = vmatpush1.msra.mxu0 0.0
        %652 = vmatprep.subr.mxu0 0.0
        %653 = vmatpush1.msra.mxu0 0.0
        %654 = vmatprep.subr.mxu0 0.0
        %655 = vmatpush1.msra.mxu0 0.0
        %656 = vmatprep.subr.mxu0 0.0
        %657 = vmatpush1.msra.mxu0 0.0
        %658 = vmatprep.subr.mxu0 0.0
        %659 = vmatpush1.msra.mxu0 0.0
        %660 = vmatprep.subr.mxu0 0.0
        %661 = vmatpush1.msra.mxu0 0.0
        %662 = vmatprep.subr.mxu0 0.0
        %663 = vmatpush1.msra.mxu0 0.0
        %664 = vmatprep.subr.mxu0 0.0
        %665 = vmatpush1.msra.mxu0 0.0
        %666 = vmatprep.subr.mxu0 0.0
        %667 = vmatpush1.msra.mxu0 0.0
        %668 = vmatprep.subr.mxu0 0.0
        %669 = vmatpush1.msra.mxu0 0.0
        %670 = vmatprep.subr.mxu0 0.0
        %671 = vmatpush1.msra.mxu0 0.0
        %672 = vmatprep.subr.mxu0 0.0
        %673 = vmatpush1.msra.mxu0 0.0
        %674 = vmatprep.subr.mxu0 0.0
        %675 = vmatpush1.msra.mxu0 0.0
        %676 = vmatprep.subr.mxu0 0.0
        %677 = vmatpush1.msra.mxu0 0.0
        %678 = vmatprep.subr.mxu0 0.0
        %679 = vmatpush1.msra.mxu0 0.0
        %680 = vmatprep.subr.mxu0 0.0
        %681 = vmatpush1.msra.mxu0 0.0
        %682 = vmatprep.mubr.f32.mxu0 0.0
        %683 = vmatmul.mubr.f32.gmra.mrb[0].mxu0 %v616
        %v684 = vpop.f32.mrb[0].mxu0
        %v685 = vadd.f32 0.0, %v684
        %v686 = vpop.f32.mrb[0].mxu0
        %687 = vdwg.mxu0
        %v688 = vadd.f32 %v617, %v685
        %v689 = vtanh.pop %v688
        %690 = vst [vmem:[#allocation2] sm:$0xff] %v689
        %s691 = scalar_lea.vmem [#allocation2], 8
        %v692 = vld [vmem:[%s691] sm:$0xff]
        %693 = vmatprep.subr.mxu0 0.0
        %694 = vmatpush1.msra.mxu0 %v600
        %695 = vmatprep.subr.mxu0 0.0
        %696 = vmatpush1.msra.mxu0 %v601
        %697 = vmatprep.subr.mxu0 0.0
        %698 = vmatpush1.msra.mxu0 %v602
        %699 = vmatprep.subr.mxu0 0.0
        %700 = vmatpush1.msra.mxu0 %v603
        %701 = vmatprep.subr.mxu0 0.0
        %702 = vmatpush1.msra.mxu0 %v604
        %703 = vmatprep.subr.mxu0 0.0
        %704 = vmatpush1.msra.mxu0 %v605
        %705 = vmatprep.subr.mxu0 0.0
        %706 = vmatpush1.msra.mxu0 %v606
        %707 = vmatprep.subr.mxu0 0.0
        %708 = vmatpush1.msra.mxu0 %v607
        %709 = vmatprep.subr.mxu0 0.0
        %710 = vmatpush1.msra.mxu0 %v608
        %711 = vmatprep.subr.mxu0 0.0
        %712 = vmatpush1.msra.mxu0 %v609
        %713 = vmatprep.subr.mxu0 0.0
        %714 = vmatpush1.msra.mxu0 %v610
        %715 = vmatprep.subr.mxu0 0.0
        %716 = vmatpush1.msra.mxu0 %v611
        %717 = vmatprep.subr.mxu0 0.0
        %718 = vmatpush1.msra.mxu0 %v612
        %719 = vmatprep.subr.mxu0 0.0
        %720 = vmatpush1.msra.mxu0 %v613
        %721 = vmatprep.subr.mxu0 0.0
        %722 = vmatpush1.msra.mxu0 %v614
        %723 = vmatprep.subr.mxu0 0.0
        %724 = vmatpush1.msra.mxu0 %v615
        %725 = vmatprep.subr.mxu0 0.0
        %726 = vmatpush1.msra.mxu0 0.0
        %727 = vmatprep.subr.mxu0 0.0
        %728 = vmatpush1.msra.mxu0 0.0
        %729 = vmatprep.subr.mxu0 0.0
        %730 = vmatpush1.msra.mxu0 0.0
        %731 = vmatprep.subr.mxu0 0.0
        %732 = vmatpush1.msra.mxu0 0.0
        %733 = vmatprep.subr.mxu0 0.0
        %734 = vmatpush1.msra.mxu0 0.0
        %735 = vmatprep.subr.mxu0 0.0
        %736 = vmatpush1.msra.mxu0 0.0
        %737 = vmatprep.subr.mxu0 0.0
        %738 = vmatpush1.msra.mxu0 0.0
        %739 = vmatprep.subr.mxu0 0.0
        %740 = vmatpush1.msra.mxu0 0.0
        %741 = vmatprep.subr.mxu0 0.0
        %742 = vmatpush1.msra.mxu0 0.0
        %743 = vmatprep.subr.mxu0 0.0
        %744 = vmatpush1.msra.mxu0 0.0
        %745 = vmatprep.subr.mxu0 0.0
        %746 = vmatpush1.msra.mxu0 0.0
        %747 = vmatprep.subr.mxu0 0.0
        %748 = vmatpush1.msra.mxu0 0.0
        %749 = vmatprep.subr.mxu0 0.0
        %750 = vmatpush1.msra.mxu0 0.0
        %751 = vmatprep.subr.mxu0 0.0
        %752 = vmatpush1.msra.mxu0 0.0
        %753 = vmatprep.subr.mxu0 0.0
        %754 = vmatpush1.msra.mxu0 0.0
        %755 = vmatprep.subr.mxu0 0.0
        %756 = vmatpush1.msra.mxu0 0.0
        %757 = vmatprep.mubr.f32.mxu0 0.0
        %758 = vmatmul.mubr.f32.gmra.mrb[0].mxu0 %v689
        %v759 = vpop.f32.mrb[0].mxu0
        %v760 = vadd.f32 0.0, %v759
        %v761 = vpop.f32.mrb[0].mxu0
        %762 = vdwg.mxu0
        %v763 = vadd.f32 %v692, %v760
        %v764 = vtanh.pop %v763
        %765 = vst [vmem:[%s691] sm:$0xff] %v764
        %s766 = scalar_lea.vmem [#allocation2], 16
        %v767 = vld [vmem:[%s766] sm:$0xff]
        %768 = vmatprep.subr.mxu0 0.0
        %769 = vmatpush1.msra.mxu0 %v600
        %770 = vmatprep.subr.mxu0 0.0
        %771 = vmatpush1.msra.mxu0 %v601
        %772 = vmatprep.subr.mxu0 0.0
        %773 = vmatpush1.msra.mxu0 %v602
        %774 = vmatprep.subr.mxu0 0.0
        %775 = vmatpush1.msra.mxu0 %v603
        %776 = vmatprep.subr.mxu0 0.0
        %777 = vmatpush1.msra.mxu0 %v604
        %778 = vmatprep.subr.mxu0 0.0
        %779 = vmatpush1.msra.mxu0 %v605
        %780 = vmatprep.subr.mxu0 0.0
        %781 = vmatpush1.msra.mxu0 %v606
        %782 = vmatprep.subr.mxu0 0.0
        %783 = vmatpush1.msra.mxu0 %v607
        %784 = vmatprep.subr.mxu0 0.0
        %785 = vmatpush1.msra.mxu0 %v608
        %786 = vmatprep.subr.mxu0 0.0
        %787 = vmatpush1.msra.mxu0 %v609
        %788 = vmatprep.subr.mxu0 0.0
        %789 = vmatpush1.msra.mxu0 %v610
        %790 = vmatprep.subr.mxu0 0.0
        %791 = vmatpush1.msra.mxu0 %v611
        %792 = vmatprep.subr.mxu0 0.0
        %793 = vmatpush1.msra.mxu0 %v612
        %794 = vmatprep.subr.mxu0 0.0
        %795 = vmatpush1.msra.mxu0 %v613
        %796 = vmatprep.subr.mxu0 0.0
        %797 = vmatpush1.msra.mxu0 %v614
        %798 = vmatprep.subr.mxu0 0.0
        %799 = vmatpush1.msra.mxu0 %v615
        %800 = vmatprep.subr.mxu0 0.0
        %801 = vmatpush1.msra.mxu0 0.0
        %802 = vmatprep.subr.mxu0 0.0
        %803 = vmatpush1.msra.mxu0 0.0
        %804 = vmatprep.subr.mxu0 0.0
        %805 = vmatpush1.msra.mxu0 0.0
        %806 = vmatprep.subr.mxu0 0.0
        %807 = vmatpush1.msra.mxu0 0.0
        %808 = vmatprep.subr.mxu0 0.0
        %809 = vmatpush1.msra.mxu0 0.0
        %810 = vmatprep.subr.mxu0 0.0
        %811 = vmatpush1.msra.mxu0 0.0
        %812 = vmatprep.subr.mxu0 0.0
        %813 = vmatpush1.msra.mxu0 0.0
        %814 = vmatprep.subr.mxu0 0.0
        %815 = vmatpush1.msra.mxu0 0.0
        %816 = vmatprep.subr.mxu0 0.0
        %817 = vmatpush1.msra.mxu0 0.0
        %818 = vmatprep.subr.mxu0 0.0
        %819 = vmatpush1.msra.mxu0 0.0
        %820 = vmatprep.subr.mxu0 0.0
        %821 = vmatpush1.msra.mxu0 0.0
        %822 = vmatprep.subr.mxu0 0.0
        %823 = vmatpush1.msra.mxu0 0.0
        %824 = vmatprep.subr.mxu0 0.0
        %825 = vmatpush1.msra.mxu0 0.0
        %826 = vmatprep.subr.mxu0 0.0
        %827 = vmatpush1.msra.mxu0 0.0
        %828 = vmatprep.subr.mxu0 0.0
        %829 = vmatpush1.msra.mxu0 0.0
        %830 = vmatprep.subr.mxu0 0.0
        %831 = vmatpush1.msra.mxu0 0.0
        %832 = vmatprep.mubr.f32.mxu0 0.0
        %833 = vmatmul.mubr.f32.gmra.mrb[0].mxu0 %v764
        %v834 = vpop.f32.mrb[0].mxu0
        %v835 = vadd.f32 0.0, %v834
        %v836 = vpop.f32.mrb[0].mxu0
        %837 = vdwg.mxu0
        %v838 = vadd.f32 %v767, %v835
        %v839 = vtanh.pop %v838
        %840 = vst [vmem:[%s766] sm:$0xff] %v839
        %s841 = scalar_lea.vmem [#allocation2], 24
        %v842 = vld [vmem:[%s841] sm:$0xff]
        %843 = vmatprep.subr.mxu0 0.0
        %844 = vmatpush1.msra.mxu0 %v600
        %845 = vmatprep.subr.mxu0 0.0
        %846 = vmatpush1.msra.mxu0 %v601
        %847 = vmatprep.subr.mxu0 0.0
        %848 = vmatpush1.msra.mxu0 %v602
        %849 = vmatprep.subr.mxu0 0.0
        %850 = vmatpush1.msra.mxu0 %v603
        %851 = vmatprep.subr.mxu0 0.0
        %852 = vmatpush1.msra.mxu0 %v604
        %853 = vmatprep.subr.mxu0 0.0
        %854 = vmatpush1.msra.mxu0 %v605
        %855 = vmatprep.subr.mxu0 0.0
        %856 = vmatpush1.msra.mxu0 %v606
        %857 = vmatprep.subr.mxu0 0.0
        %858 = vmatpush1.msra.mxu0 %v607
        %859 = vmatprep.subr.mxu0 0.0
        %860 = vmatpush1.msra.mxu0 %v608
        %861 = vmatprep.subr.mxu0 0.0
        %862 = vmatpush1.msra.mxu0 %v609
        %863 = vmatprep.subr.mxu0 0.0
        %864 = vmatpush1.msra.mxu0 %v610
        %865 = vmatprep.subr.mxu0 0.0
        %866 = vmatpush1.msra.mxu0 %v611
        %867 = vmatprep.subr.mxu0 0.0
        %868 = vmatpush1.msra.mxu0 %v612
        %869 = vmatprep.subr.mxu0 0.0
        %870 = vmatpush1.msra.mxu0 %v613
        %871 = vmatprep.subr.mxu0 0.0
        %872 = vmatpush1.msra.mxu0 %v614
        %873 = vmatprep.subr.mxu0 0.0
        %874 = vmatpush1.msra.mxu0 %v615
        %875 = vmatprep.subr.mxu0 0.0
        %876 = vmatpush1.msra.mxu0 0.0
        %877 = vmatprep.subr.mxu0 0.0
        %878 = vmatpush1.msra.mxu0 0.0
        %879 = vmatprep.subr.mxu0 0.0
        %880 = vmatpush1.msra.mxu0 0.0
        %881 = vmatprep.subr.mxu0 0.0
        %882 = vmatpush1.msra.mxu0 0.0
        %883 = vmatprep.subr.mxu0 0.0
        %884 = vmatpush1.msra.mxu0 0.0
        %885 = vmatprep.subr.mxu0 0.0
        %886 = vmatpush1.msra.mxu0 0.0
        %887 = vmatprep.subr.mxu0 0.0
        %888 = vmatpush1.msra.mxu0 0.0
        %889 = vmatprep.subr.mxu0 0.0
        %890 = vmatpush1.msra.mxu0 0.0
        %891 = vmatprep.subr.mxu0 0.0
        %892 = vmatpush1.msra.mxu0 0.0
        %893 = vmatprep.subr.mxu0 0.0
        %894 = vmatpush1.msra.mxu0 0.0
        %895 = vmatprep.subr.mxu0 0.0
        %896 = vmatpush1.msra.mxu0 0.0
        %897 = vmatprep.subr.mxu0 0.0
        %898 = vmatpush1.msra.mxu0 0.0
        %899 = vmatprep.subr.mxu0 0.0
        %900 = vmatpush1.msra.mxu0 0.0
        %901 = vmatprep.subr.mxu0 0.0
        %902 = vmatpush1.msra.mxu0 0.0
        %903 = vmatprep.subr.mxu0 0.0
        %904 = vmatpush1.msra.mxu0 0.0
        %905 = vmatprep.subr.mxu0 0.0
        %906 = vmatpush1.msra.mxu0 0.0
        %907 = vmatprep.mubr.f32.mxu0 0.0
        %908 = vmatmul.mubr.f32.gmra.mrb[0].mxu0 %v839
        %v909 = vpop.f32.mrb[0].mxu0
        %v910 = vadd.f32 0.0, %v909
        %v911 = vpop.f32.mrb[0].mxu0
        %912 = vdwg.mxu0
        %v913 = vadd.f32 %v842, %v910
        %v914 = vtanh.pop %v913
        %915 = vst [vmem:[%s841] sm:$0xff] %v914
        %916 = vst [vmem:[#allocation3] sm:$0xff] %v914
        %v917 = vld [vmem:[#allocation2] sm:$0xff]
        %v918 = vld [vmem:[#allocation2 + $0x8] sm:$0xff]
        %v919 = vld [vmem:[#allocation2 + $0x10] sm:$0xff]
        %v920 = vld [vmem:[#allocation2 + $0x18] sm:$0xff]
        %v921 = vpack.c.bf16 %v918, %v917
        %v922 = vpack.c.bf16 %v920, %v919
        %v923 = vld [vmem:[#allocation12] sm:$0xf]
        %v924 = vld [vmem:[#allocation12 + $0x4] sm:$0xf]
        %v925 = vld [vmem:[#allocation12 + $0x8] sm:$0xf]
        %v926 = vld [vmem:[#allocation12 + $0xc] sm:$0xf]
        %v927 = vld [vmem:[#allocation12 + $0x10] sm:$0xf]
        %v928 = vld [vmem:[#allocation12 + $0x14] sm:$0xf]
        %v929 = vld [vmem:[#allocation12 + $0x18] sm:$0xf]
        %v930 = vld [vmem:[#allocation12 + $0x1c] sm:$0xf]
        %v931 = vld [vmem:[#allocation12 + $0x20] sm:$0xf]
        %v932 = vld [vmem:[#allocation12 + $0x24] sm:$0xf]
        %v933 = vld [vmem:[#allocation12 + $0x28] sm:$0xf]
        %v934 = vld [vmem:[#allocation12 + $0x2c] sm:$0xf]
        %v935 = vld [vmem:[#allocation12 + $0x30] sm:$0xf]
        %v936 = vld [vmem:[#allocation12 + $0x34] sm:$0xf]
        %v937 = vld [vmem:[#allocation12 + $0x38] sm:$0xf]
        %v938 = vld [vmem:[#allocation12 + $0x3c] sm:$0xf]
        %v939 = vld [vmem:[%s6] sm:$0x1]
        %v941 = vlaneseq
        %v942 = vshrl.u32 %v941, 7
        %v943 = vsub.s32 0, %v942
        %v944 = vrot.slane %v939, %v943
        %v962 = vunpack.c.l.b16 %v923
        %v963 = vunpack.c.l.b16 %v924
        %v964 = vunpack.c.l.b16 %v925
        %v965 = vunpack.c.l.b16 %v926
        %v966 = vunpack.c.l.b16 %v927
        %v967 = vunpack.c.l.b16 %v928
        %v968 = vunpack.c.l.b16 %v929
        %v969 = vunpack.c.l.b16 %v930
        %v970 = vunpack.c.l.b16 %v931
        %v971 = vunpack.c.l.b16 %v932
        %v972 = vunpack.c.l.b16 %v933
        %v973 = vunpack.c.l.b16 %v934
        %v974 = vunpack.c.l.b16 %v935
        %v975 = vunpack.c.l.b16 %v936
        %v976 = vunpack.c.l.b16 %v937
        %v977 = vunpack.c.l.b16 %v938
        %v978 = vpack.c.b16 %v963, %v962
        %v979 = vpack.c.b16 %v965, %v964
        %v980 = vpack.c.b16 %v967, %v966
        %v981 = vpack.c.b16 %v969, %v968
        %v982 = vpack.c.b16 %v971, %v970
        %v983 = vpack.c.b16 %v973, %v972
        %v984 = vpack.c.b16 %v975, %v974
        %v985 = vpack.c.b16 %v977, %v976
        %994 = vmatprep.subr.bf16.mxu0 0
        %995 = vmatpush1.bf16.msra.mxu0 %v978
        %996 = vmatprep.subr.bf16.mxu0 0
        %997 = vmatpush1.bf16.msra.mxu0 %v979
        %998 = vmatprep.subr.bf16.mxu0 0
        %999 = vmatpush1.bf16.msra.mxu0 %v980
        %1000 = vmatprep.subr.bf16.mxu0 0
        %1001 = vmatpush1.bf16.msra.mxu0 %v981
        %1002 = vmatprep.subr.bf16.mxu0 0
        %1003 = vmatpush1.bf16.msra.mxu0 %v982
        %1004 = vmatprep.subr.bf16.mxu0 0
        %1005 = vmatpush1.bf16.msra.mxu0 %v983
        %1006 = vmatprep.subr.bf16.mxu0 0
        %1007 = vmatpush1.bf16.msra.mxu0 %v984
        %1008 = vmatprep.subr.bf16.mxu0 0
        %1009 = vmatpush1.bf16.msra.mxu0 %v985
        %1010 = vmatprep.subr.bf16.mxu0 0
        %1011 = vmatpush1.bf16.msra.mxu0 0
        %1012 = vmatprep.subr.bf16.mxu0 0
        %1013 = vmatpush1.bf16.msra.mxu0 0
        %1014 = vmatprep.subr.bf16.mxu0 0
        %1015 = vmatpush1.bf16.msra.mxu0 0
        %1016 = vmatprep.subr.bf16.mxu0 0
        %1017 = vmatpush1.bf16.msra.mxu0 0
        %1018 = vmatprep.subr.bf16.mxu0 0
        %1019 = vmatpush1.bf16.msra.mxu0 0
        %1020 = vmatprep.subr.bf16.mxu0 0
        %1021 = vmatpush1.bf16.msra.mxu0 0
        %1022 = vmatprep.subr.bf16.mxu0 0
        %1023 = vmatpush1.bf16.msra.mxu0 0
        %1024 = vmatprep.subr.bf16.mxu0 0
        %1025 = vmatpush1.bf16.msra.mxu0 0
        %1026 = vmatprep.mubr.bf16.mxu0 0
        %1027 = vmatmul.mubr.bf16.gmra.mrb[0].mxu0 %v921
        %v1028 = vpop.f32.mrb[0].mxu0
        %v1029 = vadd.f32 %v944, %v1028
        %v1030 = vpop.f32.mrb[0].mxu0
        %v1031 = vpop.f32.mrb[0].mxu0
        %v1032 = vadd.f32 %v944, %v1031
        %v1033 = vpop.f32.mrb[0].mxu0
        %1034 = vmatprep.mubr.bf16.mxu0 0
        %1035 = vmatmul.mubr.bf16.gmra.mrb[0].mxu0 %v922
        %v1036 = vpop.f32.mrb[0].mxu0
        %v1037 = vadd.f32 %v944, %v1036
        %v1038 = vpop.f32.mrb[0].mxu0
        %v1039 = vpop.f32.mrb[0].mxu0
        %v1040 = vadd.f32 %v944, %v1039
        %v1041 = vpop.f32.mrb[0].mxu0
        %1042 = vdwg.mxu0
        %1043 = vst [vmem:[%s378] sm:$0xff] %v1029
        %1044 = vst [vmem:[%s378 + $0x8] sm:$0xff] %v1032
        %1045 = vst [vmem:[%s378 + $0x10] sm:$0xff] %v1037
        %1046 = vst [vmem:[%s378 + $0x18] sm:$0xff] %v1040
        %s1047 = sand.u32 %s207, 1
        %s1048 = scalar_lea.sflag [#allocation6], %s1047
        %s1049 = sand.u32 %s207, 1
        %s1050 = smul.addr %s1049, 32
        %s1051 = scalar_lea.vmem [#allocation13], %s1050
        // Predicated region
        $region73: #{tpu_custom_call.1} parent=47 // pred_check
          %p1052 = pneg %p217
        $region74: #{tpu_custom_call.1} parent=47 // pred_check_branch
          %1054 = sbr.rel (%p1052) target = $region76
        $region75: #{tpu_custom_call.1} parent=47 // pred_region
          %s1055 = smul.u32 4, %s31
          %s1057 = ssub.s32 512, 512
          %1058 = vsyncadd %s1048, %s1057
          %s1059 = smul.addr %s30, 8
          %s1060 = sadd.s32 %s1055, %s1059
          %s1061 = smul.addr %s1060, 128
          %s1062 = scalar_lea.hbm %s7, %s1061
          %s1063 = sshll.u32 %s1051, 4
          %s1064 = int_to_ptr.vmem [resolvable:$true] %s1063
          %1069 = dma.vmem_to_hbm [thread:$0]  %s1064, 512, %s1062, %s1048, 128, 128, 8
        $region76: #{tpu_custom_call.1} parent=47 // pred_fallthru
          _
      $region48: #{tpu_custom_call.1} parent=5 // pred_fallthru
        _
      %p1070 = scmp.le.s32.totalorder 2, %s21
      // Predicated region
      $region77: #{tpu_custom_call.1} parent=5 // pred_check
        %p1071 = pneg %p1070
      $region78: #{tpu_custom_call.1} parent=5 // pred_check_branch
        %1073 = sbr.rel (%p1071) target = $region80
      $region79: #{tpu_custom_call.1} parent=5 // pred_region
        %s1074 = ssub.s32 %s21, 2
        // Predicated region
        $region81: #{tpu_custom_call.1} parent=79 // pred_check
          %p1075 = pneg %p223
        $region82: #{tpu_custom_call.1} parent=79 // pred_check_branch
          %1077 = sbr.rel (%p1075) target = $region84
        $region83: #{tpu_custom_call.1} parent=79 // pred_region
          %s1078 = sand.u32 %s208, 1
          %s1079 = scalar_lea.sflag [#allocation6], %s1078
          %s1080 = sand.u32 %s208, 1
          %s1081 = smul.addr %s1080, 32
          %s1082 = scalar_lea.vmem [#allocation13], %s1081
          %1083 = dma.done %s1079, 512
        $region84: #{tpu_custom_call.1} parent=79 // pred_fallthru
          _
      $region80: #{tpu_custom_call.1} parent=5 // pred_fallthru
        _
    $region6: #{tpu_custom_call.1} parent=1 // loop_footer
      %s25 = sadd.s32 1, %s21
    $region7: #{tpu_custom_call.1} parent=1 // loop_footer_branch
      %20 = sbr.rel target = $region3
    $region8: #{tpu_custom_call.1} parent=1 // loop_exit
      _
    %1084 = vsyncpa [#allocation5], 1
    %s1085 = scalar_lea.sflag [#allocation5], 1
    %1086 = vsyncpa %s1085, 1
    %1087 = vsyncpa [#allocation8], 1
    %1088 = vsyncpa [#allocation11], 1
    %1089 = vsyncpa [#allocation6], 1
    %s1090 = scalar_lea.sflag [#allocation6], 1
    %1091 = vsyncpa %s1090, 1

</llo_original>
